<compile_context>
chip_gen: v7x
topology: tpu7x:2x2x1
jax: 0.10.0
libtpu: 0.0.40
codegen_flags: <defaults>
</compile_context>

<pallas_src>
import functools
import math

import jax
import jax.numpy as jnp
import numpy as np
from jax.experimental import pallas as pl
from jax.experimental.pallas import tpu as pltpu


# ----------------------------------------------------------------------------
# Kernel 1: all encoder layers, activation resident in VMEM across layers
# ----------------------------------------------------------------------------
def encoder_kernel(x_ref, ln1_g_ref, ln1_b_ref, wqkv_ref, bqkv_ref,
                   wo_ref, bo_ref, ln2_g_ref, ln2_b_ref,
                   w1_ref, b1_ref, w2_ref, b2_ref,
                   o_ref, act_ref,
                   *, num_heads, seq_len, batch_tile, compute_dtype):
    l = pl.program_id(1)
    M, D = act_ref.shape                     # M = batch_tile * seq_len
    H, P, Bt = num_heads, seq_len, batch_tile
    Dh = D // H
    cdt = compute_dtype                      # MXU operand dtype (bf16)

    # Load the embedded tokens into the resident activation once per batch tile.
    @pl.when(l == 0)
    def _init():
        act_ref[...] = x_ref[...].astype(jnp.float32)

    z = act_ref[...]                         # (M, D) float32 residual stream

    def layer_norm(v, g, b):
        # One cross-lane pass: var = E[x^2] - E[x]^2 (halves XLU reductions).
        mu = jnp.mean(v, axis=-1, keepdims=True)
        mu2 = jnp.mean(v * v, axis=-1, keepdims=True)
        var = mu2 - mu * mu
        return (v - mu) * jax.lax.rsqrt(var + 1e-5) * g + b

    def split_heads(x2d):                    # (M, D) -> (Bt*H, P, Dh)
        if Bt == 1:
            return jnp.swapaxes(x2d.reshape(P, H, Dh), 0, 1)
        x4 = x2d.reshape(Bt, P, H, Dh)
        return jnp.transpose(x4, (0, 2, 1, 3)).reshape(Bt * H, P, Dh)

    def merge_heads(x3d):                    # (Bt*H, P, Dh) -> (M, D)
        if Bt == 1:
            return jnp.swapaxes(x3d, 0, 1).reshape(P, D)
        x4 = x3d.reshape(Bt, H, P, Dh)
        return jnp.transpose(x4, (0, 2, 1, 3)).reshape(M, D)

    # ---------------- multi-head self-attention block ----------------
    zn = layer_norm(z, ln1_g_ref[0], ln1_b_ref[0])
    qkv = (jnp.dot(zn.astype(cdt), wqkv_ref[0],
                   preferred_element_type=jnp.float32) + bqkv_ref[0])   # (M, 3D)

    q = split_heads(qkv[:, :D])              # (Bt*H, P, Dh)
    k = split_heads(qkv[:, D:2 * D])
    v = split_heads(qkv[:, 2 * D:])

    scale = 1.0 / math.sqrt(Dh)
    # Batched attention: (Bt*H, P, P) scores — no cross-batch mask needed.
    s = jnp.einsum("bqd,bkd->bqk", q.astype(cdt), k.astype(cdt),
                   preferred_element_type=jnp.float32) * scale
    s = s - jnp.max(s, axis=-1, keepdims=True)
    e = jnp.exp(s)
    p = e * pl.reciprocal(jnp.sum(e, axis=-1, keepdims=True), approx=True)
    o = jnp.einsum("bqk,bkd->bqd", p.astype(cdt), v.astype(cdt),
                   preferred_element_type=jnp.float32)                  # (Bt*H,P,Dh)

    attn = merge_heads(o)                                               # (M, D)
    attn = (jnp.dot(attn.astype(cdt), wo_ref[0],
                    preferred_element_type=jnp.float32) + bo_ref[0])
    z = z + attn                             # residual (dropout p = 0.0)

    # ---------------- feed-forward block ----------------
    zn2 = layer_norm(z, ln2_g_ref[0], ln2_b_ref[0])
    h = jnp.maximum(
        jnp.dot(zn2.astype(cdt), w1_ref[0],
                preferred_element_type=jnp.float32) + b1_ref[0], 0.0)
    z = z + (jnp.dot(h.astype(cdt), w2_ref[0],
                     preferred_element_type=jnp.float32) + b2_ref[0])

    act_ref[...] = z
    # Output block is VMEM-resident across the layer axis; only the last value
    # reaches HBM.  Writing every step avoids relying on l == last gating.
    o_ref[...] = z.astype(o_ref.dtype)


# ----------------------------------------------------------------------------
# Kernel 2: final vocabulary projection, tiled over (M, V)
# ----------------------------------------------------------------------------
def fc_out_kernel(x_ref, w_ref, b_ref, o_ref, *, compute_dtype):
    logits = (jnp.dot(x_ref[...].astype(compute_dtype), w_ref[...],
                      preferred_element_type=jnp.float32) + b_ref[...])
    o_ref[...] = logits.astype(o_ref.dtype)


# ----------------------------------------------------------------------------
# Wrapper (pallas_call plumbing)
# ----------------------------------------------------------------------------
def _pick_tile(n, candidates):
    for c in candidates:
        if n % c == 0:
            return c
    return n


def vision_transformer_forward(params, patches, *, num_heads, batch_tile=None,
                               compute_dtype=jnp.bfloat16,
                               out_dtype=jnp.bfloat16):
    """patches: (B, P) int32 token ids -> logits (B, P, V)."""
    B, P = patches.shape
    D = params["token_embedding"].shape[1]
    V = params["fc_out_w"].shape[1]
    lp = params["layers"]
    L = lp["wqkv"].shape[0]
    F = lp["w1"].shape[2]
    H = num_heads

    # Glue: embedding gather + positional add, then flatten batch*seq into M.
    tok = jnp.take(params["token_embedding"], patches, axis=0)          # (B, P, D)
    pos = params["positional_embedding"][:P][None]                      # (1, P, D)
    x = (tok + pos).reshape(B * P, D).astype(jnp.float32)

    # Default batch tile: nb = B/Bt >= 2 so the parallel batch axis can shard
    # across v7x's two TensorCores.
    if batch_tile is None:
        batch_tile = B // 2 if (B % 2 == 0 and B >= 2) else B
    Bt = batch_tile
    assert B % Bt == 0, "batch_tile must divide batch"
    nb = B // Bt
    M = Bt * P
    assert M % 8 == 0 or nb == 1, "batch_tile*seq_len should be a multiple of 8"

    cast = lambda a: a.astype(compute_dtype)
    itemsize = jnp.dtype(compute_dtype).itemsize

    def layer_spec(r, c):      # per-layer (stacked) parameter, indexed by layer l
        return pl.BlockSpec((1, r, c), lambda b, l: (l, 0, 0))

    # Explicit VMEM budget: double-buffered layer weights + resident activation
    # + attention/FFN intermediates (+ headroom).  Clamped to safe bounds.
    layer_w_bytes = (D * 3 * D + D * D + D * F + F * D) * itemsize \
        + (3 * D + 3 * D + 2 * F) * 4
    act_bytes = M * D * 4
    interm_bytes = Bt * H * P * P * 4 * 3 + M * 3 * D * 4 + M * F * 4 + M * D * 8
    enc_vmem = 2 * (2 * layer_w_bytes + act_bytes + interm_bytes)
    enc_vmem = min(max(enc_vmem, 16 << 20), 64 << 20)

    kern = functools.partial(encoder_kernel, num_heads=H, seq_len=P,
                             batch_tile=Bt, compute_dtype=compute_dtype)

    act = pl.pallas_call(
        kern,
        out_shape=jax.ShapeDtypeStruct((B * P, D), compute_dtype),
        grid=(nb, L),
        in_specs=[
            pl.BlockSpec((M, D), lambda b, l: (b, 0)),      # embedded tokens
            layer_spec(1, D), layer_spec(1, D),             # ln1 gamma / beta
            layer_spec(D, 3 * D), layer_spec(1, 3 * D),     # QKV proj W / b
            layer_spec(D, D), layer_spec(1, D),             # out proj W / b
            layer_spec(1, D), layer_spec(1, D),             # ln2 gamma / beta
            layer_spec(D, F), layer_spec(1, F),             # ffn linear1 W / b
            layer_spec(F, D), layer_spec(1, D),             # ffn linear2 W / b
        ],
        out_specs=pl.BlockSpec((M, D), lambda b, l: (b, 0)),
        scratch_shapes=[pltpu.VMEM((M, D), jnp.float32)],   # resident activation
        compiler_params=pltpu.CompilerParams(
            dimension_semantics=("parallel", "arbitrary"),
            vmem_limit_bytes=int(enc_vmem)),
    )(x,
      lp["ln1_g"], lp["ln1_b"], cast(lp["wqkv"]), lp["bqkv"],
      cast(lp["wo"]), lp["bo"], lp["ln2_g"], lp["ln2_b"],
      cast(lp["w1"]), lp["b1"], cast(lp["w2"]), lp["b2"])

    # ---- fc_out: separate pallas_call, lane-dense V tiling --------------
    BP = B * P
    tm = _pick_tile(BP, (256, 128, 64, 32, 16, 8))
    tv = _pick_tile(V, (512, 256, 128))
    fc_vmem = 3 * ((tm * D + D * tv) * itemsize + tv * 4 + tm * tv * 4)
    fc_vmem = min(max(fc_vmem, 16 << 20), 64 << 20)

    logits = pl.pallas_call(
        functools.partial(fc_out_kernel, compute_dtype=compute_dtype),
        out_shape=jax.ShapeDtypeStruct((BP, V), out_dtype),
        grid=(BP // tm, V // tv),
        in_specs=[
            pl.BlockSpec((tm, D), lambda i, j: (i, 0)),     # activations
            pl.BlockSpec((D, tv), lambda i, j: (0, j)),     # fc_out W tile
            pl.BlockSpec((1, tv), lambda i, j: (0, j)),     # fc_out b tile
        ],
        out_specs=pl.BlockSpec((tm, tv), lambda i, j: (i, j)),
        compiler_params=pltpu.CompilerParams(
            dimension_semantics=("parallel", "parallel"),
            vmem_limit_bytes=int(fc_vmem)),
    )(act, cast(params["fc_out_w"]), params["fc_out_b"])

    return logits.reshape(B, P, V)


# ----------------------------------------------------------------------------
# Parameters (layers stored stacked with a leading L axis)
# ----------------------------------------------------------------------------
def init_params(key, *, num_layers, d_model, num_heads, feedforward_dim,
                num_tokens, max_patches):
    del num_heads
    L, D, F, V = num_layers, d_model, feedforward_dim, num_tokens
    ks = jax.random.split(key, 8)
    s = 0.02
    return {
        "token_embedding": jax.random.normal(ks[0], (V, D), jnp.float32) * s,
        "positional_embedding": jax.random.normal(ks[1], (max_patches, D),
                                                  jnp.float32),
        "fc_out_w": jax.random.normal(ks[2], (D, V), jnp.float32) * s,
        "fc_out_b": jnp.zeros((1, V), jnp.float32),
        "layers": {
            "ln1_g": jnp.ones((L, 1, D), jnp.float32),
            "ln1_b": jnp.zeros((L, 1, D), jnp.float32),
            "wqkv": jax.random.normal(ks[3], (L, D, 3 * D), jnp.float32) * s,
            "bqkv": jnp.zeros((L, 1, 3 * D), jnp.float32),
            "wo": jax.random.normal(ks[4], (L, D, D), jnp.float32) * s,
            "bo": jnp.zeros((L, 1, D), jnp.float32),
            "ln2_g": jnp.ones((L, 1, D), jnp.float32),
            "ln2_b": jnp.zeros((L, 1, D), jnp.float32),
            "w1": jax.random.normal(ks[5], (L, D, F), jnp.float32) * s,
            "b1": jax.random.normal(ks[6], (L, 1, F), jnp.float32) * s,
            "w2": jax.random.normal(ks[7], (L, F, D), jnp.float32) * s,
            "b2": jnp.zeros((L, 1, D), jnp.float32),
        },
    }


# ----------------------------------------------------------------------------
# Pure-JAX reference with matching numerics (bf16 MXU operands, f32 elsewhere)
# ----------------------------------------------------------------------------
def ref_forward(params, patches, *, num_heads, compute_dtype=jnp.bfloat16):
    def ln(v, g, b):
        mu = v.mean(-1, keepdims=True)
        var = ((v - mu) ** 2).mean(-1, keepdims=True)
        return (v - mu) * jax.lax.rsqrt(var + 1e-5) * g + b

    def mm(a, w):
        return jnp.einsum("...d,de->...e", a.astype(compute_dtype),
                          w.astype(compute_dtype),
                          preferred_element_type=jnp.float32)

    B, P = patches.shape
    D = params["token_embedding"].shape[1]
    H = num_heads
    Dh = D // H
    lp = params["layers"]
    L = lp["wqkv"].shape[0]

    x = (jnp.take(params["token_embedding"], patches, axis=0)
         + params["positional_embedding"][:P][None]).astype(jnp.float32)
    for i in range(L):
        zn = ln(x, lp["ln1_g"][i], lp["ln1_b"][i])
        qkv = mm(zn, lp["wqkv"][i]) + lp["bqkv"][i]
        q, k, v = qkv[..., :D], qkv[..., D:2 * D], qkv[..., 2 * D:]
        qh = q.reshape(B, P, H, Dh).astype(compute_dtype)
        kh = k.reshape(B, P, H, Dh).astype(compute_dtype)
        vh = v.reshape(B, P, H, Dh).astype(compute_dtype)
        s = jnp.einsum("bqhd,bkhd->bhqk", qh, kh,
                       preferred_element_type=jnp.float32) / math.sqrt(Dh)
        a = jax.nn.softmax(s, axis=-1)
        o = jnp.einsum("bhqk,bkhd->bqhd", a.astype(compute_dtype), vh,
                       preferred_element_type=jnp.float32).reshape(B, P, D)
        x = x + mm(o, lp["wo"][i]) + lp["bo"][i]
        zn2 = ln(x, lp["ln2_g"][i], lp["ln2_b"][i])
        h = jax.nn.relu(mm(zn2, lp["w1"][i]) + lp["b1"][i])
        x = x + mm(h, lp["w2"][i]) + lp["b2"][i]
    return mm(x, params["fc_out_w"]) + params["fc_out_b"]


# ----------------------------------------------------------------------------
# TODO(synk): build_vocabulary / tokenize_image / generate_image are host-side
# Python dict & sampling logic with no Pallas equivalent; only forward() is
# implemented here (dropout p=0.0 as per the VisionTransformer default).
# ----------------------------------------------------------------------------
if __name__ == "__main__":
    # Small, module-consistent shapes.
    B = 2            # batch
    P = 8            # number of patches (sequence length)
    D = 32           # d_model
    H = 4            # num_heads (D % H == 0)
    F = 64           # feedforward_dim
    V = 128          # vocabulary size (lane-dense logits)
    L = 2            # num_layers
    MAX_PATCHES = 256

    key = jax.random.PRNGKey(0)
    kparam, ktok = jax.random.split(key)
    params = init_params(kparam, num_layers=L, d_model=D, num_heads=H,
                         feedforward_dim=F, num_tokens=V,
                         max_patches=MAX_PATCHES)
    patches = jax.random.randint(ktok, (B, P), 0, V, dtype=jnp.int32)

    fwd = jax.jit(functools.partial(vision_transformer_forward, num_heads=H))
    logits = jax.block_until_ready(fwd(params, patches))

    assert logits.shape == (B, P, V), logits.shape
    assert bool(jnp.all(jnp.isfinite(logits.astype(jnp.float32))))

    ref = jax.block_until_ready(ref_forward(params, patches, num_heads=H))
    np.testing.assert_allclose(np.asarray(logits, dtype=np.float32),
                               np.asarray(ref), rtol=2e-2, atol=2e-2)

    print("KERNEL_OK")
</pallas_src>

<mosaic_0001>
module attributes {stable_mosaic.version = 11 : i64} {
  func.func @fc_out_kernel(%arg0: i32, %arg1: i32, %arg2: memref<16x32xbf16, #tpu.memory_space<vmem>>, %arg3: memref<32x128xbf16, #tpu.memory_space<vmem>>, %arg4: memref<1x128xf32, #tpu.memory_space<vmem>>, %arg5: memref<16x128xbf16, #tpu.memory_space<vmem>>) attributes {dimension_semantics = [#tpu.dimension_semantics<parallel>, #tpu.dimension_semantics<parallel>], iteration_bounds = array<i64: 1, 1>, scalar_prefetch = 0 : i64, scratch_operands = 0 : i64, tpu.core_type = #tpu.core_type<tc>, window_params = [{transform_indices = @transform_0, window_bounds = array<i64: 16, 32>}, {transform_indices = @transform_1, window_bounds = array<i64: 32, 128>}, {transform_indices = @transform_2, window_bounds = array<i64: 1, 128>}, {transform_indices = @transform_3, window_bounds = array<i64: 16, 128>}]} {
    %c0 = arith.constant 0 : index
    %c0_0 = arith.constant 0 : index
    %0 = vector.load %arg2[%c0, %c0_0] : memref<16x32xbf16, #tpu.memory_space<vmem>>, vector<16x32xbf16>
    %c0_1 = arith.constant 0 : index
    %c0_2 = arith.constant 0 : index
    %1 = vector.load %arg3[%c0_1, %c0_2] : memref<32x128xbf16, #tpu.memory_space<vmem>>, vector<32x128xbf16>
    %cst = arith.constant dense<0.000000e+00> : vector<16x128xf32>
    %2 = tpu.matmul %0, %1, %cst {dimension_numbers = #tpu.dot_dimension_numbers<[1], [0], [0], [1], [0, 0, 1, 1], [], []>} : vector<16x32xbf16>, vector<32x128xbf16>, vector<16x128xf32> -> vector<16x128xf32>
    %c0_3 = arith.constant 0 : index
    %c0_4 = arith.constant 0 : index
    %3 = vector.load %arg4[%c0_3, %c0_4] : memref<1x128xf32, #tpu.memory_space<vmem>>, vector<1x128xf32>
    %4 = vector.broadcast %3 : vector<1x128xf32> to vector<16x128xf32>
    %5 = arith.addf %2, %4 : vector<16x128xf32>
    %6 = arith.truncf %5 : vector<16x128xf32> to vector<16x128xbf16>
    %c0_5 = arith.constant 0 : index
    %c0_6 = arith.constant 0 : index
    %7 = vector.load %arg5[%c0_5, %c0_6] : memref<16x128xbf16, #tpu.memory_space<vmem>>, vector<16x128xbf16>
    tpu.vector_store %arg5[%c0_5, %c0_6], %6 {strides = array<i32>} : memref<16x128xbf16, #tpu.memory_space<vmem>>, vector<16x128xbf16>,
    return
  }
  func.func @transform_0(%arg0: i32, %arg1: i32) -> (i32, i32) {
    %c0_i32 = arith.constant 0 : i32
    %c0_i32_0 = arith.constant 0 : i32
    return %arg0, %c0_i32 : i32, i32
  }
  func.func @transform_1(%arg0: i32, %arg1: i32) -> (i32, i32) {
    %c0_i32 = arith.constant 0 : i32
    %c0_i32_0 = arith.constant 0 : i32
    return %c0_i32, %arg1 : i32, i32
  }
  func.func @transform_2(%arg0: i32, %arg1: i32) -> (i32, i32) {
    %c0_i32 = arith.constant 0 : i32
    %c0_i32_0 = arith.constant 0 : i32
    return %c0_i32, %arg1 : i32, i32
  }
  func.func @transform_3(%arg0: i32, %arg1: i32) -> (i32, i32) {
    %c0_i32 = arith.constant 0 : i32
    return %arg0, %arg1 : i32, i32
  }
}

module attributes {stable_mosaic.version = 11 : i64} {
  func.func @encoder_kernel(%arg0: i32, %arg1: i32, %arg2: memref<8x32xf32, #tpu.memory_space<vmem>>, %arg3: memref<1x1x32xf32, #tpu.memory_space<vmem>>, %arg4: memref<1x1x32xf32, #tpu.memory_space<vmem>>, %arg5: memref<1x32x96xbf16, #tpu.memory_space<vmem>>, %arg6: memref<1x1x96xf32, #tpu.memory_space<vmem>>, %arg7: memref<1x32x32xbf16, #tpu.memory_space<vmem>>, %arg8: memref<1x1x32xf32, #tpu.memory_space<vmem>>, %arg9: memref<1x1x32xf32, #tpu.memory_space<vmem>>, %arg10: memref<1x1x32xf32, #tpu.memory_space<vmem>>, %arg11: memref<1x32x64xbf16, #tpu.memory_space<vmem>>, %arg12: memref<1x1x64xf32, #tpu.memory_space<vmem>>, %arg13: memref<1x64x32xbf16, #tpu.memory_space<vmem>>, %arg14: memref<1x1x32xf32, #tpu.memory_space<vmem>>, %arg15: memref<8x32xbf16, #tpu.memory_space<vmem>>, %arg16: memref<8x32xf32, #tpu.memory_space<vmem>>) attributes {dimension_semantics = [#tpu.dimension_semantics<parallel>, #tpu.dimension_semantics<arbitrary>], iteration_bounds = array<i64: 2, 2>, scalar_prefetch = 0 : i64, scratch_operands = 1 : i64, tpu.core_type = #tpu.core_type<tc>, window_params = [{transform_indices = @transform_0, window_bounds = array<i64: 8, 32>}, {transform_indices = @transform_1, window_bounds = array<i64: 1, 1, 32>}, {transform_indices = @transform_2, window_bounds = array<i64: 1, 1, 32>}, {transform_indices = @transform_3, window_bounds = array<i64: 1, 32, 96>}, {transform_indices = @transform_4, window_bounds = array<i64: 1, 1, 96>}, {transform_indices = @transform_5, window_bounds = array<i64: 1, 32, 32>}, {transform_indices = @transform_6, window_bounds = array<i64: 1, 1, 32>}, {transform_indices = @transform_7, window_bounds = array<i64: 1, 1, 32>}, {transform_indices = @transform_8, window_bounds = array<i64: 1, 1, 32>}, {transform_indices = @transform_9, window_bounds = array<i64: 1, 32, 64>}, {transform_indices = @transform_10, window_bounds = array<i64: 1, 1, 64>}, {transform_indices = @transform_11, window_bounds = array<i64: 1, 64, 32>}, {transform_indices = @transform_12, window_bounds = array<i64: 1, 1, 32>}, {transform_indices = @transform_13, window_bounds = array<i64: 8, 32>}]} {
    %c0_i32 = arith.constant 0 : i32
    %0 = arith.cmpi eq, %arg1, %c0_i32 : i32
    %1 = arith.extui %0 : i1 to i32
    %c0_i32_0 = arith.constant 0 : i32
    %2 = arith.cmpi ne, %1, %c0_i32_0 : i32
    scf.if %2 {
      %c0_61 = arith.constant 0 : index
      %c0_62 = arith.constant 0 : index
      %124 = vector.load %arg2[%c0_61, %c0_62] : memref<8x32xf32, #tpu.memory_space<vmem>>, vector<8x32xf32>
      %c0_63 = arith.constant 0 : index
      %c0_64 = arith.constant 0 : index
      %125 = vector.load %arg16[%c0_63, %c0_64] : memref<8x32xf32, #tpu.memory_space<vmem>>, vector<8x32xf32>
      tpu.vector_store %arg16[%c0_63, %c0_64], %124 {strides = array<i32>} : memref<8x32xf32, #tpu.memory_space<vmem>>, vector<8x32xf32>,
    } else {
    }
    %c0 = arith.constant 0 : index
    %c0_1 = arith.constant 0 : index
    %3 = vector.load %arg16[%c0, %c0_1] : memref<8x32xf32, #tpu.memory_space<vmem>>, vector<8x32xf32>
    %c0_2 = arith.constant 0 : index
    %c0_3 = arith.constant 0 : index
    %c0_4 = arith.constant 0 : index
    %4 = vector.load %arg3[%c0_2, %c0_3, %c0_4] : memref<1x1x32xf32, #tpu.memory_space<vmem>>, vector<1x1x32xf32>
    %5 = vector.shape_cast %4 : vector<1x1x32xf32> to vector<1x32xf32>
    %c0_5 = arith.constant 0 : index
    %c0_6 = arith.constant 0 : index
    %c0_7 = arith.constant 0 : index
    %6 = vector.load %arg4[%c0_5, %c0_6, %c0_7] : memref<1x1x32xf32, #tpu.memory_space<vmem>>, vector<1x1x32xf32>
    %7 = vector.shape_cast %6 : vector<1x1x32xf32> to vector<1x32xf32>
    %cst = arith.constant dense<0.000000e+00> : vector<8xf32>
    %8 = vector.multi_reduction <add>, %3, %cst [1] : vector<8x32xf32> to vector<8xf32>
    %9 = vector.shape_cast %8 : vector<8xf32> to vector<8x1xf32>
    %cst_8 = arith.constant 3.200000e+01 : f32
    %10 = vector.broadcast %cst_8 : f32 to vector<8x1xf32>
    %11 = arith.divf %9, %10 : vector<8x1xf32>
    %12 = arith.mulf %3, %3 : vector<8x32xf32>
    %cst_9 = arith.constant dense<0.000000e+00> : vector<8xf32>
    %13 = vector.multi_reduction <add>, %12, %cst_9 [1] : vector<8x32xf32> to vector<8xf32>
    %14 = vector.shape_cast %13 : vector<8xf32> to vector<8x1xf32>
    %cst_10 = arith.constant 3.200000e+01 : f32
    %15 = vector.broadcast %cst_10 : f32 to vector<8x1xf32>
    %16 = arith.divf %14, %15 : vector<8x1xf32>
    %17 = arith.mulf %11, %11 : vector<8x1xf32>
    %18 = arith.subf %16, %17 : vector<8x1xf32>
    %19 = vector.broadcast %11 : vector<8x1xf32> to vector<8x32xf32>
    %20 = arith.subf %3, %19 : vector<8x32xf32>
    %cst_11 = arith.constant 9.99999974E-6 : f32
    %21 = vector.broadcast %cst_11 : f32 to vector<8x1xf32>
    %22 = arith.addf %18, %21 : vector<8x1xf32>
    %23 = math.rsqrt %22 : vector<8x1xf32>
    %24 = vector.broadcast %23 : vector<8x1xf32> to vector<8x32xf32>
    %25 = arith.mulf %20, %24 : vector<8x32xf32>
    %26 = vector.broadcast %5 : vector<1x32xf32> to vector<8x32xf32>
    %27 = arith.mulf %25, %26 : vector<8x32xf32>
    %28 = vector.broadcast %7 : vector<1x32xf32> to vector<8x32xf32>
    %29 = arith.addf %27, %28 : vector<8x32xf32>
    %30 = arith.truncf %29 : vector<8x32xf32> to vector<8x32xbf16>
    %c0_12 = arith.constant 0 : index
    %c0_13 = arith.constant 0 : index
    %c0_14 = arith.constant 0 : index
    %31 = vector.load %arg5[%c0_12, %c0_13, %c0_14] : memref<1x32x96xbf16, #tpu.memory_space<vmem>>, vector<1x32x96xbf16>
    %32 = vector.shape_cast %31 : vector<1x32x96xbf16> to vector<32x96xbf16>
    %cst_15 = arith.constant dense<0.000000e+00> : vector<8x96xf32>
    %33 = tpu.matmul %30, %32, %cst_15 {dimension_numbers = #tpu.dot_dimension_numbers<[1], [0], [0], [1], [0, 0, 1, 1], [], []>} : vector<8x32xbf16>, vector<32x96xbf16>, vector<8x96xf32> -> vector<8x96xf32>
    %c0_16 = arith.constant 0 : index
    %c0_17 = arith.constant 0 : index
    %c0_18 = arith.constant 0 : index
    %34 = vector.load %arg6[%c0_16, %c0_17, %c0_18] : memref<1x1x96xf32, #tpu.memory_space<vmem>>, vector<1x1x96xf32>
    %35 = vector.shape_cast %34 : vector<1x1x96xf32> to vector<1x96xf32>
    %36 = vector.broadcast %35 : vector<1x96xf32> to vector<8x96xf32>
    %37 = arith.addf %33, %36 : vector<8x96xf32>
    %38 = vector.extract_strided_slice %37 {offsets = [0, 0], sizes = [8, 32], strides = [1, 1]} : vector<8x96xf32> to vector<8x32xf32>
    %39 = vector.shape_cast %38 : vector<8x32xf32> to vector<8x4x8xf32>
    %40 = tpu.transpose %39, [1, 0, 2] : vector<8x4x8xf32> -> vector<4x8x8xf32>
    %41 = vector.extract_strided_slice %37 {offsets = [0, 32], sizes = [8, 32], strides = [1, 1]} : vector<8x96xf32> to vector<8x32xf32>
    %42 = vector.shape_cast %41 : vector<8x32xf32> to vector<8x4x8xf32>
    %43 = tpu.transpose %42, [1, 0, 2] : vector<8x4x8xf32> -> vector<4x8x8xf32>
    %44 = vector.extract_strided_slice %37 {offsets = [0, 64], sizes = [8, 32], strides = [1, 1]} : vector<8x96xf32> to vector<8x32xf32>
    %45 = vector.shape_cast %44 : vector<8x32xf32> to vector<8x4x8xf32>
    %46 = tpu.transpose %45, [1, 0, 2] : vector<8x4x8xf32> -> vector<4x8x8xf32>
    %47 = arith.truncf %40 : vector<4x8x8xf32> to vector<4x8x8xbf16>
    %48 = arith.truncf %43 : vector<4x8x8xf32> to vector<4x8x8xbf16>
    "tpu.trace_start"() <{level = 10 : i32, message = "bqd,bkd->bqk"}> : () -> ()
    %cst_19 = arith.constant dense<0.000000e+00> : vector<4x8x8xf32>
    %49 = tpu.matmul %47, %48, %cst_19 {dimension_numbers = #tpu.dot_dimension_numbers<[2], [2], [1], [1], [0, 0, 0, 1, 1, 1], [0], [0]>} : vector<4x8x8xbf16>, vector<4x8x8xbf16>, vector<4x8x8xf32> -> vector<4x8x8xf32>
    "tpu.trace_stop"() : () -> ()
    %cst_20 = arith.constant 0.353553385 : f32
    %50 = vector.broadcast %cst_20 : f32 to vector<4x8x8xf32>
    %51 = arith.mulf %49, %50 : vector<4x8x8xf32>
    %cst_21 = arith.constant dense<0xFF800000> : vector<4x8xf32>
    %52 = vector.multi_reduction <maximumf>, %51, %cst_21 [2] : vector<4x8x8xf32> to vector<4x8xf32>
    %53 = vector.shape_cast %52 : vector<4x8xf32> to vector<4x8x1xf32>
    %54 = vector.broadcast %53 : vector<4x8x1xf32> to vector<4x8x8xf32>
    %55 = arith.subf %51, %54 : vector<4x8x8xf32>
    %56 = math.exp %55 : vector<4x8x8xf32>
    %cst_22 = arith.constant dense<0.000000e+00> : vector<4x8xf32>
    %57 = vector.multi_reduction <add>, %56, %cst_22 [2] : vector<4x8x8xf32> to vector<4x8xf32>
    %58 = vector.shape_cast %57 : vector<4x8xf32> to vector<4x8x1xf32>
    %59 = tpu.reciprocal %58 {approx = true} : vector<4x8x1xf32> -> vector<4x8x1xf32>
    %60 = vector.broadcast %59 : vector<4x8x1xf32> to vector<4x8x8xf32>
    %61 = arith.mulf %56, %60 : vector<4x8x8xf32>
    %62 = arith.truncf %61 : vector<4x8x8xf32> to vector<4x8x8xbf16>
    %63 = arith.truncf %46 : vector<4x8x8xf32> to vector<4x8x8xbf16>
    "tpu.trace_start"() <{level = 10 : i32, message = "bqk,bkd->bqd"}> : () -> ()
    %cst_23 = arith.constant dense<0.000000e+00> : vector<4x8x8xf32>
    %64 = tpu.matmul %62, %63, %cst_23 {dimension_numbers = #tpu.dot_dimension_numbers<[2], [1], [1], [2], [0, 0, 0, 1, 1, 2], [0], [0]>} : vector<4x8x8xbf16>, vector<4x8x8xbf16>, vector<4x8x8xf32> -> vector<4x8x8xf32>
    "tpu.trace_stop"() : () -> ()
    %65 = tpu.transpose %64, [1, 0, 2] : vector<4x8x8xf32> -> vector<8x4x8xf32>
    %66 = vector.shape_cast %65 : vector<8x4x8xf32> to vector<8x32xf32>
    %67 = arith.truncf %66 : vector<8x32xf32> to vector<8x32xbf16>
    %c0_24 = arith.constant 0 : index
    %c0_25 = arith.constant 0 : index
    %c0_26 = arith.constant 0 : index
    %68 = vector.load %arg7[%c0_24, %c0_25, %c0_26] : memref<1x32x32xbf16, #tpu.memory_space<vmem>>, vector<1x32x32xbf16>
    %69 = vector.shape_cast %68 : vector<1x32x32xbf16> to vector<32x32xbf16>
    %cst_27 = arith.constant dense<0.000000e+00> : vector<8x32xf32>
    %70 = tpu.matmul %67, %69, %cst_27 {dimension_numbers = #tpu.dot_dimension_numbers<[1], [0], [0], [1], [0, 0, 1, 1], [], []>} : vector<8x32xbf16>, vector<32x32xbf16>, vector<8x32xf32> -> vector<8x32xf32>
    %c0_28 = arith.constant 0 : index
    %c0_29 = arith.constant 0 : index
    %c0_30 = arith.constant 0 : index
    %71 = vector.load %arg8[%c0_28, %c0_29, %c0_30] : memref<1x1x32xf32, #tpu.memory_space<vmem>>, vector<1x1x32xf32>
    %72 = vector.shape_cast %71 : vector<1x1x32xf32> to vector<1x32xf32>
    %73 = vector.broadcast %72 : vector<1x32xf32> to vector<8x32xf32>
    %74 = arith.addf %70, %73 : vector<8x32xf32>
    %75 = arith.addf %3, %74 : vector<8x32xf32>
    %c0_31 = arith.constant 0 : index
    %c0_32 = arith.constant 0 : index
    %c0_33 = arith.constant 0 : index
    %76 = vector.load %arg9[%c0_31, %c0_32, %c0_33] : memref<1x1x32xf32, #tpu.memory_space<vmem>>, vector<1x1x32xf32>
    %77 = vector.shape_cast %76 : vector<1x1x32xf32> to vector<1x32xf32>
    %c0_34 = arith.constant 0 : index
    %c0_35 = arith.constant 0 : index
    %c0_36 = arith.constant 0 : index
    %78 = vector.load %arg10[%c0_34, %c0_35, %c0_36] : memref<1x1x32xf32, #tpu.memory_space<vmem>>, vector<1x1x32xf32>
    %79 = vector.shape_cast %78 : vector<1x1x32xf32> to vector<1x32xf32>
    %cst_37 = arith.constant dense<0.000000e+00> : vector<8xf32>
    %80 = vector.multi_reduction <add>, %75, %cst_37 [1] : vector<8x32xf32> to vector<8xf32>
    %81 = vector.shape_cast %80 : vector<8xf32> to vector<8x1xf32>
    %cst_38 = arith.constant 3.200000e+01 : f32
    %82 = vector.broadcast %cst_38 : f32 to vector<8x1xf32>
    %83 = arith.divf %81, %82 : vector<8x1xf32>
    %84 = arith.mulf %75, %75 : vector<8x32xf32>
    %cst_39 = arith.constant dense<0.000000e+00> : vector<8xf32>
    %85 = vector.multi_reduction <add>, %84, %cst_39 [1] : vector<8x32xf32> to vector<8xf32>
    %86 = vector.shape_cast %85 : vector<8xf32> to vector<8x1xf32>
    %cst_40 = arith.constant 3.200000e+01 : f32
    %87 = vector.broadcast %cst_40 : f32 to vector<8x1xf32>
    %88 = arith.divf %86, %87 : vector<8x1xf32>
    %89 = arith.mulf %83, %83 : vector<8x1xf32>
    %90 = arith.subf %88, %89 : vector<8x1xf32>
    %91 = vector.broadcast %83 : vector<8x1xf32> to vector<8x32xf32>
    %92 = arith.subf %75, %91 : vector<8x32xf32>
    %cst_41 = arith.constant 9.99999974E-6 : f32
    %93 = vector.broadcast %cst_41 : f32 to vector<8x1xf32>
    %94 = arith.addf %90, %93 : vector<8x1xf32>
    %95 = math.rsqrt %94 : vector<8x1xf32>
    %96 = vector.broadcast %95 : vector<8x1xf32> to vector<8x32xf32>
    %97 = arith.mulf %92, %96 : vector<8x32xf32>
    %98 = vector.broadcast %77 : vector<1x32xf32> to vector<8x32xf32>
    %99 = arith.mulf %97, %98 : vector<8x32xf32>
    %100 = vector.broadcast %79 : vector<1x32xf32> to vector<8x32xf32>
    %101 = arith.addf %99, %100 : vector<8x32xf32>
    %102 = arith.truncf %101 : vector<8x32xf32> to vector<8x32xbf16>
    %c0_42 = arith.constant 0 : index
    %c0_43 = arith.constant 0 : index
    %c0_44 = arith.constant 0 : index
    %103 = vector.load %arg11[%c0_42, %c0_43, %c0_44] : memref<1x32x64xbf16, #tpu.memory_space<vmem>>, vector<1x32x64xbf16>
    %104 = vector.shape_cast %103 : vector<1x32x64xbf16> to vector<32x64xbf16>
    %cst_45 = arith.constant dense<0.000000e+00> : vector<8x64xf32>
    %105 = tpu.matmul %102, %104, %cst_45 {dimension_numbers = #tpu.dot_dimension_numbers<[1], [0], [0], [1], [0, 0, 1, 1], [], []>} : vector<8x32xbf16>, vector<32x64xbf16>, vector<8x64xf32> -> vector<8x64xf32>
    %c0_46 = arith.constant 0 : index
    %c0_47 = arith.constant 0 : index
    %c0_48 = arith.constant 0 : index
    %106 = vector.load %arg12[%c0_46, %c0_47, %c0_48] : memref<1x1x64xf32, #tpu.memory_space<vmem>>, vector<1x1x64xf32>
    %107 = vector.shape_cast %106 : vector<1x1x64xf32> to vector<1x64xf32>
    %108 = vector.broadcast %107 : vector<1x64xf32> to vector<8x64xf32>
    %109 = arith.addf %105, %108 : vector<8x64xf32>
    %cst_49 = arith.constant 0.000000e+00 : f32
    %110 = vector.broadcast %cst_49 : f32 to vector<8x64xf32>
    %111 = arith.maximumf %109, %110 : vector<8x64xf32>
    %112 = arith.truncf %111 : vector<8x64xf32> to vector<8x64xbf16>
    %c0_50 = arith.constant 0 : index
    %c0_51 = arith.constant 0 : index
    %c0_52 = arith.constant 0 : index
    %113 = vector.load %arg13[%c0_50, %c0_51, %c0_52] : memref<1x64x32xbf16, #tpu.memory_space<vmem>>, vector<1x64x32xbf16>
    %114 = vector.shape_cast %113 : vector<1x64x32xbf16> to vector<64x32xbf16>
    %cst_53 = arith.constant dense<0.000000e+00> : vector<8x32xf32>
    %115 = tpu.matmul %112, %114, %cst_53 {dimension_numbers = #tpu.dot_dimension_numbers<[1], [0], [0], [1], [0, 0, 1, 1], [], []>} : vector<8x64xbf16>, vector<64x32xbf16>, vector<8x32xf32> -> vector<8x32xf32>
    %c0_54 = arith.constant 0 : index
    %c0_55 = arith.constant 0 : index
    %c0_56 = arith.constant 0 : index
    %116 = vector.load %arg14[%c0_54, %c0_55, %c0_56] : memref<1x1x32xf32, #tpu.memory_space<vmem>>, vector<1x1x32xf32>
    %117 = vector.shape_cast %116 : vector<1x1x32xf32> to vector<1x32xf32>
    %118 = vector.broadcast %117 : vector<1x32xf32> to vector<8x32xf32>
    %119 = arith.addf %115, %118 : vector<8x32xf32>
    %120 = arith.addf %75, %119 : vector<8x32xf32>
    %c0_57 = arith.constant 0 : index
    %c0_58 = arith.constant 0 : index
    %121 = vector.load %arg16[%c0_57, %c0_58] : memref<8x32xf32, #tpu.memory_space<vmem>>, vector<8x32xf32>
    tpu.vector_store %arg16[%c0_57, %c0_58], %120 {strides = array<i32>} : memref<8x32xf32, #tpu.memory_space<vmem>>, vector<8x32xf32>,
    %122 = arith.truncf %120 : vector<8x32xf32> to vector<8x32xbf16>
    %c0_59 = arith.constant 0 : index
    %c0_60 = arith.constant 0 : index
    %123 = vector.load %arg15[%c0_59, %c0_60] : memref<8x32xbf16, #tpu.memory_space<vmem>>, vector<8x32xbf16>
    tpu.vector_store %arg15[%c0_59, %c0_60], %122 {strides = array<i32>} : memref<8x32xbf16, #tpu.memory_space<vmem>>, vector<8x32xbf16>,
    return
  }
  func.func @transform_0(%arg0: i32, %arg1: i32) -> (i32, i32) {
    %c0_i32 = arith.constant 0 : i32
    %c0_i32_0 = arith.constant 0 : i32
    return %arg0, %c0_i32 : i32, i32
  }
  func.func @transform_1(%arg0: i32, %arg1: i32) -> (i32, i32, i32) {
    %c0_i32 = arith.constant 0 : i32
    %c0_i32_0 = arith.constant 0 : i32
    %c0_i32_1 = arith.constant 0 : i32
    return %arg1, %c0_i32, %c0_i32_0 : i32, i32, i32
  }
  func.func @transform_2(%arg0: i32, %arg1: i32) -> (i32, i32, i32) {
    %c0_i32 = arith.constant 0 : i32
    %c0_i32_0 = arith.constant 0 : i32
    %c0_i32_1 = arith.constant 0 : i32
    return %arg1, %c0_i32, %c0_i32_0 : i32, i32, i32
  }
  func.func @transform_3(%arg0: i32, %arg1: i32) -> (i32, i32, i32) {
    %c0_i32 = arith.constant 0 : i32
    %c0_i32_0 = arith.constant 0 : i32
    %c0_i32_1 = arith.constant 0 : i32
    return %arg1, %c0_i32, %c0_i32_0 : i32, i32, i32
  }
  func.func @transform_4(%arg0: i32, %arg1: i32) -> (i32, i32, i32) {
    %c0_i32 = arith.constant 0 : i32
    %c0_i32_0 = arith.constant 0 : i32
    %c0_i32_1 = arith.constant 0 : i32
    return %arg1, %c0_i32, %c0_i32_0 : i32, i32, i32
  }
  func.func @transform_5(%arg0: i32, %arg1: i32) -> (i32, i32, i32) {
    %c0_i32 = arith.constant 0 : i32
    %c0_i32_0 = arith.constant 0 : i32
    %c0_i32_1 = arith.constant 0 : i32
    return %arg1, %c0_i32, %c0_i32_0 : i32, i32, i32
  }
  func.func @transform_6(%arg0: i32, %arg1: i32) -> (i32, i32, i32) {
    %c0_i32 = arith.constant 0 : i32
    %c0_i32_0 = arith.constant 0 : i32
    %c0_i32_1 = arith.constant 0 : i32
    return %arg1, %c0_i32, %c0_i32_0 : i32, i32, i32
  }
  func.func @transform_7(%arg0: i32, %arg1: i32) -> (i32, i32, i32) {
    %c0_i32 = arith.constant 0 : i32
    %c0_i32_0 = arith.constant 0 : i32
    %c0_i32_1 = arith.constant 0 : i32
    return %arg1, %c0_i32, %c0_i32_0 : i32, i32, i32
  }
  func.func @transform_8(%arg0: i32, %arg1: i32) -> (i32, i32, i32) {
    %c0_i32 = arith.constant 0 : i32
    %c0_i32_0 = arith.constant 0 : i32
    %c0_i32_1 = arith.constant 0 : i32
    return %arg1, %c0_i32, %c0_i32_0 : i32, i32, i32
  }
  func.func @transform_9(%arg0: i32, %arg1: i32) -> (i32, i32, i32) {
    %c0_i32 = arith.constant 0 : i32
    %c0_i32_0 = arith.constant 0 : i32
    %c0_i32_1 = arith.constant 0 : i32
    return %arg1, %c0_i32, %c0_i32_0 : i32, i32, i32
  }
  func.func @transform_10(%arg0: i32, %arg1: i32) -> (i32, i32, i32) {
    %c0_i32 = arith.constant 0 : i32
    %c0_i32_0 = arith.constant 0 : i32
    %c0_i32_1 = arith.constant 0 : i32
    return %arg1, %c0_i32, %c0_i32_0 : i32, i32, i32
  }
  func.func @transform_11(%arg0: i32, %arg1: i32) -> (i32, i32, i32) {
    %c0_i32 = arith.constant 0 : i32
    %c0_i32_0 = arith.constant 0 : i32
    %c0_i32_1 = arith.constant 0 : i32
    return %arg1, %c0_i32, %c0_i32_0 : i32, i32, i32
  }
  func.func @transform_12(%arg0: i32, %arg1: i32) -> (i32, i32, i32) {
    %c0_i32 = arith.constant 0 : i32
    %c0_i32_0 = arith.constant 0 : i32
    %c0_i32_1 = arith.constant 0 : i32
    return %arg1, %c0_i32, %c0_i32_0 : i32, i32, i32
  }
  func.func @transform_13(%arg0: i32, %arg1: i32) -> (i32, i32) {
    %c0_i32 = arith.constant 0 : i32
    %c0_i32_0 = arith.constant 0 : i32
    return %arg0, %c0_i32 : i32, i32
  }
}

</mosaic_0001>

<llo_original>
// kernel: vision_transformer_forward.3
$region0: #{vision_transformer_forward.3}
  #allocation0 [shape = 'u32[]', space=smem, size = 0x4, offset = 0x4, fixed_abs, tag = 'smem constant byte address 0x4 - core index']
  #allocation1 [shape = 'u32[144,128]{1,0:T(1,128)}', space=vmem, size = 0x12000, scoped, tag = 'internal scratch']
  %s0 = inlined_call_operand.vmem [shape: bf16[16,32], index: 0, kind: input, shape index: {}]
  %s1 = inlined_call_operand.vmem [shape: bf16[32,128], index: 1, kind: input, shape index: {}]
  %s2 = inlined_call_operand.vmem [shape: f32[1,128], index: 2, kind: input, shape index: {}]
  %s3 = inlined_call_operand.hbm [shape: bf16[16,128], index: 3, kind: output, shape index: {}]
  %s4 = sld [smem:[#allocation0]]
  $region22: #{vision_transformer_forward.3} parent=0
    _
  %s6 = ssub.s32 1, %s4
  %s7 = scalar_select 0, %s6, %s4
  $region1: #{vision_transformer_forward.3} parent=0
    #allocation2 [shape = 'u8[4096]{0}', space=vmem, size = 0x1000, scoped, tag = 'output window, operand 0, single buffered']
    #allocation3 [shape = 's32[1]{0}', space=sflag, size = 0x4, scoped, tag = 'scoped memory for vision_transformer_forward.3']
    %8 = vsyncpa [#allocation3], 0
    // Predicated region
    $region2: #{vision_transformer_forward.3} parent=1 // pred_check
      _
    $region3: #{vision_transformer_forward.3} parent=1 // pred_check_branch
      %10 = sbr.rel (0) target = $region5
    $region4: #{vision_transformer_forward.3} parent=1 // pred_region
      _
    $region5: #{vision_transformer_forward.3} parent=1 // pred_fallthru
      _
    // Predicated region
    $region6: #{vision_transformer_forward.3} parent=1 // pred_check
      _
    $region7: #{vision_transformer_forward.3} parent=1 // pred_check_branch
      %12 = sbr.rel (0) target = $region9
    $region8: #{vision_transformer_forward.3} parent=1 // pred_region
      _
    $region9: #{vision_transformer_forward.3} parent=1 // pred_fallthru
      _
    // Predicated region
    $region10: #{vision_transformer_forward.3} parent=1 // pred_check
      _
    $region11: #{vision_transformer_forward.3} parent=1 // pred_check_branch
      %14 = sbr.rel (0) target = $region13
    $region12: #{vision_transformer_forward.3} parent=1 // pred_region
      _
    $region13: #{vision_transformer_forward.3} parent=1 // pred_fallthru
      _
    %v16 = vld [vmem:[%s0] sm:$0xf]
    %v17 = vld [vmem:[%s0 + $0x4] sm:$0xf]
    %v18 = vld [vmem:[%s1] sm:$0xf]
    %v19 = vld [vmem:[%s1 + $0x4] sm:$0xf]
    %v20 = vld [vmem:[%s1 + $0x8] sm:$0xf]
    %v21 = vld [vmem:[%s1 + $0xc] sm:$0xf]
    %v22 = vld [vmem:[%s2] sm:$0x1]
    %v24 = vlaneseq
    %v25 = vshrl.u32 %v24, 7
    %v26 = vsub.s32 0, %v25
    %v27 = vrot.slane %v22, %v26
    %v31 = vunpack.c.l.b16 %v16
    %v32 = vunpack.c.l.b16 %v17
    %v33 = vpack.c.b16 %v32, %v31
    %v38 = vunpack.c.l.b16 %v18
    %v39 = vunpack.c.l.b16 %v19
    %v40 = vunpack.c.l.b16 %v20
    %v41 = vunpack.c.l.b16 %v21
    %v42 = vpack.c.b16 %v39, %v38
    %v43 = vpack.c.b16 %v41, %v40
    %vm46 = vcmask 261120
    %v48 = vsel %vm46, %v33, 0
    %50 = vmatprep.subr.bf16.mxu0 0
    %51 = vmatpush1.bf16.msra.mxu0 %v42
    %52 = vmatprep.subr.bf16.mxu0 0
    %53 = vmatpush1.bf16.msra.mxu0 %v43
    %54 = vmatprep.subr.bf16.mxu0 0
    %55 = vmatpush1.bf16.msra.mxu0 0
    %56 = vmatprep.subr.bf16.mxu0 0
    %57 = vmatpush1.bf16.msra.mxu0 0
    %58 = vmatprep.subr.bf16.mxu0 0
    %59 = vmatpush1.bf16.msra.mxu0 0
    %60 = vmatprep.subr.bf16.mxu0 0
    %61 = vmatpush1.bf16.msra.mxu0 0
    %62 = vmatprep.subr.bf16.mxu0 0
    %63 = vmatpush1.bf16.msra.mxu0 0
    %64 = vmatprep.subr.bf16.mxu0 0
    %65 = vmatpush1.bf16.msra.mxu0 0
    %66 = vmatprep.subr.bf16.mxu0 0
    %67 = vmatpush1.bf16.msra.mxu0 0
    %68 = vmatprep.subr.bf16.mxu0 0
    %69 = vmatpush1.bf16.msra.mxu0 0
    %70 = vmatprep.subr.bf16.mxu0 0
    %71 = vmatpush1.bf16.msra.mxu0 0
    %72 = vmatprep.subr.bf16.mxu0 0
    %73 = vmatpush1.bf16.msra.mxu0 0
    %74 = vmatprep.subr.bf16.mxu0 0
    %75 = vmatpush1.bf16.msra.mxu0 0
    %76 = vmatprep.subr.bf16.mxu0 0
    %77 = vmatpush1.bf16.msra.mxu0 0
    %78 = vmatprep.subr.bf16.mxu0 0
    %79 = vmatpush1.bf16.msra.mxu0 0
    %80 = vmatprep.subr.bf16.mxu0 0
    %81 = vmatpush1.bf16.msra.mxu0 0
    %82 = vmatprep.mubr.bf16.mxu0 0
    %83 = vmatmul.mubr.bf16.gmra.mrb[0].mxu0 %v48
    %v84 = vpop.f32.mrb[0].mxu0
    %v85 = vadd.f32 %v27, %v84
    %v86 = vpop.f32.mrb[0].mxu0
    %v87 = vpop.f32.mrb[0].mxu0
    %v88 = vadd.f32 %v27, %v87
    %v89 = vpop.f32.mrb[0].mxu0
    %90 = vdwg.mxu0
    %v91 = vpack.c.bf16 %v88, %v85
    %v93 = vunpack.c.l.b16 %v91
    %v94 = vunpack.c.h.b16 %v91
    %v95 = vpack.c.b16 %v93, %v93
    %v96 = vpack.c.b16 %v94, %v94
    %99 = vst [vmem:[#allocation2] sm:$0xf] %v95
    %100 = vst [vmem:[#allocation2 + $0x4] sm:$0xf] %v96
    // Predicated region
    $region14: #{vision_transformer_forward.3} parent=1 // pred_check
      _
    $region15: #{vision_transformer_forward.3} parent=1 // pred_check_branch
      %102 = sbr.rel (0) target = $region17
    $region16: #{vision_transformer_forward.3} parent=1 // pred_region
      %s104 = ssub.s32 128, 128
      %105 = vsyncadd [#allocation3], %s104
      %s106 = sshll.u32 [#allocation2], 4
      %s107 = int_to_ptr.vmem [resolvable:$true] %s106
      %112 = dma.vmem_to_hbm [thread:$0]  %s107, 128, %s3, [#allocation3], 64, 64, 4
    $region17: #{vision_transformer_forward.3} parent=1 // pred_fallthru
      _
    // Predicated region
    $region18: #{vision_transformer_forward.3} parent=1 // pred_check
      _
    $region19: #{vision_transformer_forward.3} parent=1 // pred_check_branch
      %114 = sbr.rel (0) target = $region21
    $region20: #{vision_transformer_forward.3} parent=1 // pred_region
      %115 = dma.done [#allocation3], 128
    $region21: #{vision_transformer_forward.3} parent=1 // pred_fallthru
      _
    %116 = vsyncpa [#allocation3], 1

// kernel: vision_transformer_forward.2
$region0: #{vision_transformer_forward.2}
  #allocation0 [shape = 'u32[]', space=smem, size = 0x4, offset = 0x4, fixed_abs, tag = 'smem constant byte address 0x4 - core index']
  #allocation1 [shape = 'u32[144,128]{1,0:T(1,128)}', space=vmem, size = 0x12000, scoped, tag = 'internal scratch']
  #allocation2 [shape = 'f32[8,32]{1,0:T(8,128)}', space=vmem, size = 0x1000, scoped, tag = 'scratch operand']
  %s0 = inlined_call_operand.vmem [shape: f32[16,32], index: 0, kind: input, shape index: {}]
  %s1 = inlined_call_operand.vmem [shape: f32[2,1,32], index: 1, kind: input, shape index: {}]
  %s2 = inlined_call_operand.vmem [shape: f32[2,1,32], index: 2, kind: input, shape index: {}]
  %s3 = inlined_call_operand.vmem [shape: bf16[2,32,96], index: 3, kind: input, shape index: {}]
  %s4 = inlined_call_operand.vmem [shape: f32[2,1,96], index: 4, kind: input, shape index: {}]
  %s5 = inlined_call_operand.vmem [shape: bf16[2,32,32], index: 5, kind: input, shape index: {}]
  %s6 = inlined_call_operand.vmem [shape: f32[2,1,32], index: 6, kind: input, shape index: {}]
  %s7 = inlined_call_operand.vmem [shape: f32[2,1,32], index: 7, kind: input, shape index: {}]
  %s8 = inlined_call_operand.vmem [shape: f32[2,1,32], index: 8, kind: input, shape index: {}]
  %s9 = inlined_call_operand.vmem [shape: bf16[2,32,64], index: 9, kind: input, shape index: {}]
  %s10 = inlined_call_operand.vmem [shape: f32[2,1,64], index: 10, kind: input, shape index: {}]
  %s11 = inlined_call_operand.vmem [shape: bf16[2,64,32], index: 11, kind: input, shape index: {}]
  %s12 = inlined_call_operand.vmem [shape: f32[2,1,32], index: 12, kind: input, shape index: {}]
  %s13 = inlined_call_operand.vmem [shape: bf16[16,32], index: 13, kind: output, shape index: {}]
  %s14 = sld [smem:[#allocation0]]
  $region89: #{vision_transformer_forward.2} parent=0
    _
  %s16 = ssub.s32 1, %s14
  %s17 = scalar_select 0, %s16, %s14
  loop: start=0, step=1, limit=6
  $region2: #{vision_transformer_forward.2} parent=0 // loop_pre_header
    _
  $region3: #{vision_transformer_forward.2} parent=0 // loop_header
    %s19 = sphi 0, %s23
    %p20 = scmp.ge.s32.totalorder %s19, 6
    %s26 = sphi 0, %s38
    %s27 = sphi 0, %s34
    %s28 = sphi 0, %s26
    %s29 = sphi 0, %s27
    %s30 = sphi 0, %s28
    %s31 = sphi 0, %s29
    %s41 = sphi 0, %s43
    %s44 = sphi 0, %s41
    %s45 = sphi 0, %s44
    %s61 = sphi 0, %s45
    %s67 = sphi 0, %s69
    %s70 = sphi 0, %s67
    %s71 = sphi 0, %s70
    %s87 = sphi 0, %s71
    %s93 = sphi 0, %s95
    %s96 = sphi 0, %s93
    %s97 = sphi 0, %s96
    %s113 = sphi 0, %s97
    %s119 = sphi 0, %s121
    %s122 = sphi 0, %s119
    %s123 = sphi 0, %s122
    %s139 = sphi 0, %s123
    %s145 = sphi 0, %s147
    %s148 = sphi 0, %s145
    %s149 = sphi 0, %s148
    %s165 = sphi 0, %s149
    %s171 = sphi 0, %s173
    %s174 = sphi 0, %s171
    %s175 = sphi 0, %s174
    %s191 = sphi 0, %s175
    %s197 = sphi 0, %s199
    %s200 = sphi 0, %s197
    %s201 = sphi 0, %s200
    %s217 = sphi 0, %s201
    %s223 = sphi 0, %s225
    %s226 = sphi 0, %s223
    %s227 = sphi 0, %s226
    %s243 = sphi 0, %s227
    %s249 = sphi 0, %s251
    %s252 = sphi 0, %s249
    %s253 = sphi 0, %s252
    %s269 = sphi 0, %s253
    %s275 = sphi 0, %s277
    %s278 = sphi 0, %s275
    %s279 = sphi 0, %s278
    %s295 = sphi 0, %s279
    %s301 = sphi 0, %s303
    %s304 = sphi 0, %s301
    %s305 = sphi 0, %s304
    %s321 = sphi 0, %s305
    %s327 = sphi 0, %s329
    %s330 = sphi 0, %s327
    %s331 = sphi 0, %s330
    %s347 = sphi 0, %s331
    %s353 = sphi 0, %s355
    %s356 = sphi 0, %s353
    %s357 = sphi 0, %s356
    %s373 = sphi 0, %s357
    %s379 = sphi 0, %s381
    %s382 = sphi 0, %s379
    %s383 = sphi 0, %s382
    %s399 = sphi 0, %s383
  $region4: #{vision_transformer_forward.2} parent=0 // loop_header_branch
    %22 = sbr.rel (%p20) target = $region8
  $region5: #{vision_transformer_forward.2} parent=0 // loop_body
    %s24 = ssub.s32 %s19, 1
    %s25 = ssub.s32 %s19, 2
    %s32 = sadd.s32 1, %s27
    %p33 = scmp.ge.s32.totalorder %s32, 2
    %s34 = scalar_select %p33, 0, %s32
    %s35 = sadd.s32 1, %s26
    %s36 = scalar_select %p33, %s35, %s26
    %p37 = scmp.ge.s32.totalorder %s36, 2
    %s38 = scalar_select %p37, 0, %s36
    %s39 = ssub.s32 %s26, %s38
    %p40 = scmp.eq.s32.totalorder %s39, 0
    %s42 = sadd.s32 %s41, 1
    %s43 = scalar_select %p40, %s41, %s42
    %p46 = pneg %p40
    %p47 = scmp.eq.s32.totalorder %s19, 3
    %p48 = por %p46, %p47
    %p49 = scmp.ne.s32.totalorder %s41, %s44
    %p50 = scmp.eq.s32.totalorder %s19, 0
    %p51 = por %p49, %p50
    %p52 = scmp.ne.s32.totalorder %s41, %s44
    %p53 = scmp.eq.s32.totalorder %s24, 3
    %p54 = por %p52, %p53
    %p55 = scmp.ne.s32.totalorder %s44, %s45
    %p56 = scmp.eq.s32.totalorder %s24, 0
    %p57 = por %p55, %p56
    %p58 = scmp.ne.s32.totalorder %s44, %s45
    %p59 = scmp.eq.s32.totalorder %s25, 3
    %p60 = por %p58, %p59
    %p62 = scmp.ne.s32.totalorder %s45, %s61
    %p63 = scmp.eq.s32.totalorder %s25, 0
    %p64 = por %p62, %p63
    %s65 = ssub.s32 %s27, %s34
    %p66 = scmp.eq.s32.totalorder %s65, 0
    %s68 = sadd.s32 %s67, 1
    %s69 = scalar_select %p66, %s67, %s68
    %p72 = pneg %p66
    %p73 = scmp.eq.s32.totalorder %s19, 3
    %p74 = por %p72, %p73
    %p75 = scmp.ne.s32.totalorder %s67, %s70
    %p76 = scmp.eq.s32.totalorder %s19, 0
    %p77 = por %p75, %p76
    %p78 = scmp.ne.s32.totalorder %s67, %s70
    %p79 = scmp.eq.s32.totalorder %s24, 3
    %p80 = por %p78, %p79
    %p81 = scmp.ne.s32.totalorder %s70, %s71
    %p82 = scmp.eq.s32.totalorder %s24, 0
    %p83 = por %p81, %p82
    %p84 = scmp.ne.s32.totalorder %s70, %s71
    %p85 = scmp.eq.s32.totalorder %s25, 3
    %p86 = por %p84, %p85
    %p88 = scmp.ne.s32.totalorder %s71, %s87
    %p89 = scmp.eq.s32.totalorder %s25, 0
    %p90 = por %p88, %p89
    %s91 = ssub.s32 %s27, %s34
    %p92 = scmp.eq.s32.totalorder %s91, 0
    %s94 = sadd.s32 %s93, 1
    %s95 = scalar_select %p92, %s93, %s94
    %p98 = pneg %p92
    %p99 = scmp.eq.s32.totalorder %s19, 3
    %p100 = por %p98, %p99
    %p101 = scmp.ne.s32.totalorder %s93, %s96
    %p102 = scmp.eq.s32.totalorder %s19, 0
    %p103 = por %p101, %p102
    %p104 = scmp.ne.s32.totalorder %s93, %s96
    %p105 = scmp.eq.s32.totalorder %s24, 3
    %p106 = por %p104, %p105
    %p107 = scmp.ne.s32.totalorder %s96, %s97
    %p108 = scmp.eq.s32.totalorder %s24, 0
    %p109 = por %p107, %p108
    %p110 = scmp.ne.s32.totalorder %s96, %s97
    %p111 = scmp.eq.s32.totalorder %s25, 3
    %p112 = por %p110, %p111
    %p114 = scmp.ne.s32.totalorder %s97, %s113
    %p115 = scmp.eq.s32.totalorder %s25, 0
    %p116 = por %p114, %p115
    %s117 = ssub.s32 %s27, %s34
    %p118 = scmp.eq.s32.totalorder %s117, 0
    %s120 = sadd.s32 %s119, 1
    %s121 = scalar_select %p118, %s119, %s120
    %p124 = pneg %p118
    %p125 = scmp.eq.s32.totalorder %s19, 3
    %p126 = por %p124, %p125
    %p127 = scmp.ne.s32.totalorder %s119, %s122
    %p128 = scmp.eq.s32.totalorder %s19, 0
    %p129 = por %p127, %p128
    %p130 = scmp.ne.s32.totalorder %s119, %s122
    %p131 = scmp.eq.s32.totalorder %s24, 3
    %p132 = por %p130, %p131
    %p133 = scmp.ne.s32.totalorder %s122, %s123
    %p134 = scmp.eq.s32.totalorder %s24, 0
    %p135 = por %p133, %p134
    %p136 = scmp.ne.s32.totalorder %s122, %s123
    %p137 = scmp.eq.s32.totalorder %s25, 3
    %p138 = por %p136, %p137
    %p140 = scmp.ne.s32.totalorder %s123, %s139
    %p141 = scmp.eq.s32.totalorder %s25, 0
    %p142 = por %p140, %p141
    %s143 = ssub.s32 %s27, %s34
    %p144 = scmp.eq.s32.totalorder %s143, 0
    %s146 = sadd.s32 %s145, 1
    %s147 = scalar_select %p144, %s145, %s146
    %p150 = pneg %p144
    %p151 = scmp.eq.s32.totalorder %s19, 3
    %p152 = por %p150, %p151
    %p153 = scmp.ne.s32.totalorder %s145, %s148
    %p154 = scmp.eq.s32.totalorder %s19, 0
    %p155 = por %p153, %p154
    %p156 = scmp.ne.s32.totalorder %s145, %s148
    %p157 = scmp.eq.s32.totalorder %s24, 3
    %p158 = por %p156, %p157
    %p159 = scmp.ne.s32.totalorder %s148, %s149
    %p160 = scmp.eq.s32.totalorder %s24, 0
    %p161 = por %p159, %p160
    %p162 = scmp.ne.s32.totalorder %s148, %s149
    %p163 = scmp.eq.s32.totalorder %s25, 3
    %p164 = por %p162, %p163
    %p166 = scmp.ne.s32.totalorder %s149, %s165
    %p167 = scmp.eq.s32.totalorder %s25, 0
    %p168 = por %p166, %p167
    %s169 = ssub.s32 %s27, %s34
    %p170 = scmp.eq.s32.totalorder %s169, 0
    %s172 = sadd.s32 %s171, 1
    %s173 = scalar_select %p170, %s171, %s172
    %p176 = pneg %p170
    %p177 = scmp.eq.s32.totalorder %s19, 3
    %p178 = por %p176, %p177
    %p179 = scmp.ne.s32.totalorder %s171, %s174
    %p180 = scmp.eq.s32.totalorder %s19, 0
    %p181 = por %p179, %p180
    %p182 = scmp.ne.s32.totalorder %s171, %s174
    %p183 = scmp.eq.s32.totalorder %s24, 3
    %p184 = por %p182, %p183
    %p185 = scmp.ne.s32.totalorder %s174, %s175
    %p186 = scmp.eq.s32.totalorder %s24, 0
    %p187 = por %p185, %p186
    %p188 = scmp.ne.s32.totalorder %s174, %s175
    %p189 = scmp.eq.s32.totalorder %s25, 3
    %p190 = por %p188, %p189
    %p192 = scmp.ne.s32.totalorder %s175, %s191
    %p193 = scmp.eq.s32.totalorder %s25, 0
    %p194 = por %p192, %p193
    %s195 = ssub.s32 %s27, %s34
    %p196 = scmp.eq.s32.totalorder %s195, 0
    %s198 = sadd.s32 %s197, 1
    %s199 = scalar_select %p196, %s197, %s198
    %p202 = pneg %p196
    %p203 = scmp.eq.s32.totalorder %s19, 3
    %p204 = por %p202, %p203
    %p205 = scmp.ne.s32.totalorder %s197, %s200
    %p206 = scmp.eq.s32.totalorder %s19, 0
    %p207 = por %p205, %p206
    %p208 = scmp.ne.s32.totalorder %s197, %s200
    %p209 = scmp.eq.s32.totalorder %s24, 3
    %p210 = por %p208, %p209
    %p211 = scmp.ne.s32.totalorder %s200, %s201
    %p212 = scmp.eq.s32.totalorder %s24, 0
    %p213 = por %p211, %p212
    %p214 = scmp.ne.s32.totalorder %s200, %s201
    %p215 = scmp.eq.s32.totalorder %s25, 3
    %p216 = por %p214, %p215
    %p218 = scmp.ne.s32.totalorder %s201, %s217
    %p219 = scmp.eq.s32.totalorder %s25, 0
    %p220 = por %p218, %p219
    %s221 = ssub.s32 %s27, %s34
    %p222 = scmp.eq.s32.totalorder %s221, 0
    %s224 = sadd.s32 %s223, 1
    %s225 = scalar_select %p222, %s223, %s224
    %p228 = pneg %p222
    %p229 = scmp.eq.s32.totalorder %s19, 3
    %p230 = por %p228, %p229
    %p231 = scmp.ne.s32.totalorder %s223, %s226
    %p232 = scmp.eq.s32.totalorder %s19, 0
    %p233 = por %p231, %p232
    %p234 = scmp.ne.s32.totalorder %s223, %s226
    %p235 = scmp.eq.s32.totalorder %s24, 3
    %p236 = por %p234, %p235
    %p237 = scmp.ne.s32.totalorder %s226, %s227
    %p238 = scmp.eq.s32.totalorder %s24, 0
    %p239 = por %p237, %p238
    %p240 = scmp.ne.s32.totalorder %s226, %s227
    %p241 = scmp.eq.s32.totalorder %s25, 3
    %p242 = por %p240, %p241
    %p244 = scmp.ne.s32.totalorder %s227, %s243
    %p245 = scmp.eq.s32.totalorder %s25, 0
    %p246 = por %p244, %p245
    %s247 = ssub.s32 %s27, %s34
    %p248 = scmp.eq.s32.totalorder %s247, 0
    %s250 = sadd.s32 %s249, 1
    %s251 = scalar_select %p248, %s249, %s250
    %p254 = pneg %p248
    %p255 = scmp.eq.s32.totalorder %s19, 3
    %p256 = por %p254, %p255
    %p257 = scmp.ne.s32.totalorder %s249, %s252
    %p258 = scmp.eq.s32.totalorder %s19, 0
    %p259 = por %p257, %p258
    %p260 = scmp.ne.s32.totalorder %s249, %s252
    %p261 = scmp.eq.s32.totalorder %s24, 3
    %p262 = por %p260, %p261
    %p263 = scmp.ne.s32.totalorder %s252, %s253
    %p264 = scmp.eq.s32.totalorder %s24, 0
    %p265 = por %p263, %p264
    %p266 = scmp.ne.s32.totalorder %s252, %s253
    %p267 = scmp.eq.s32.totalorder %s25, 3
    %p268 = por %p266, %p267
    %p270 = scmp.ne.s32.totalorder %s253, %s269
    %p271 = scmp.eq.s32.totalorder %s25, 0
    %p272 = por %p270, %p271
    %s273 = ssub.s32 %s27, %s34
    %p274 = scmp.eq.s32.totalorder %s273, 0
    %s276 = sadd.s32 %s275, 1
    %s277 = scalar_select %p274, %s275, %s276
    %p280 = pneg %p274
    %p281 = scmp.eq.s32.totalorder %s19, 3
    %p282 = por %p280, %p281
    %p283 = scmp.ne.s32.totalorder %s275, %s278
    %p284 = scmp.eq.s32.totalorder %s19, 0
    %p285 = por %p283, %p284
    %p286 = scmp.ne.s32.totalorder %s275, %s278
    %p287 = scmp.eq.s32.totalorder %s24, 3
    %p288 = por %p286, %p287
    %p289 = scmp.ne.s32.totalorder %s278, %s279
    %p290 = scmp.eq.s32.totalorder %s24, 0
    %p291 = por %p289, %p290
    %p292 = scmp.ne.s32.totalorder %s278, %s279
    %p293 = scmp.eq.s32.totalorder %s25, 3
    %p294 = por %p292, %p293
    %p296 = scmp.ne.s32.totalorder %s279, %s295
    %p297 = scmp.eq.s32.totalorder %s25, 0
    %p298 = por %p296, %p297
    %s299 = ssub.s32 %s27, %s34
    %p300 = scmp.eq.s32.totalorder %s299, 0
    %s302 = sadd.s32 %s301, 1
    %s303 = scalar_select %p300, %s301, %s302
    %p306 = pneg %p300
    %p307 = scmp.eq.s32.totalorder %s19, 3
    %p308 = por %p306, %p307
    %p309 = scmp.ne.s32.totalorder %s301, %s304
    %p310 = scmp.eq.s32.totalorder %s19, 0
    %p311 = por %p309, %p310
    %p312 = scmp.ne.s32.totalorder %s301, %s304
    %p313 = scmp.eq.s32.totalorder %s24, 3
    %p314 = por %p312, %p313
    %p315 = scmp.ne.s32.totalorder %s304, %s305
    %p316 = scmp.eq.s32.totalorder %s24, 0
    %p317 = por %p315, %p316
    %p318 = scmp.ne.s32.totalorder %s304, %s305
    %p319 = scmp.eq.s32.totalorder %s25, 3
    %p320 = por %p318, %p319
    %p322 = scmp.ne.s32.totalorder %s305, %s321
    %p323 = scmp.eq.s32.totalorder %s25, 0
    %p324 = por %p322, %p323
    %s325 = ssub.s32 %s27, %s34
    %p326 = scmp.eq.s32.totalorder %s325, 0
    %s328 = sadd.s32 %s327, 1
    %s329 = scalar_select %p326, %s327, %s328
    %p332 = pneg %p326
    %p333 = scmp.eq.s32.totalorder %s19, 3
    %p334 = por %p332, %p333
    %p335 = scmp.ne.s32.totalorder %s327, %s330
    %p336 = scmp.eq.s32.totalorder %s19, 0
    %p337 = por %p335, %p336
    %p338 = scmp.ne.s32.totalorder %s327, %s330
    %p339 = scmp.eq.s32.totalorder %s24, 3
    %p340 = por %p338, %p339
    %p341 = scmp.ne.s32.totalorder %s330, %s331
    %p342 = scmp.eq.s32.totalorder %s24, 0
    %p343 = por %p341, %p342
    %p344 = scmp.ne.s32.totalorder %s330, %s331
    %p345 = scmp.eq.s32.totalorder %s25, 3
    %p346 = por %p344, %p345
    %p348 = scmp.ne.s32.totalorder %s331, %s347
    %p349 = scmp.eq.s32.totalorder %s25, 0
    %p350 = por %p348, %p349
    %s351 = ssub.s32 %s27, %s34
    %p352 = scmp.eq.s32.totalorder %s351, 0
    %s354 = sadd.s32 %s353, 1
    %s355 = scalar_select %p352, %s353, %s354
    %p358 = pneg %p352
    %p359 = scmp.eq.s32.totalorder %s19, 3
    %p360 = por %p358, %p359
    %p361 = scmp.ne.s32.totalorder %s353, %s356
    %p362 = scmp.eq.s32.totalorder %s19, 0
    %p363 = por %p361, %p362
    %p364 = scmp.ne.s32.totalorder %s353, %s356
    %p365 = scmp.eq.s32.totalorder %s24, 3
    %p366 = por %p364, %p365
    %p367 = scmp.ne.s32.totalorder %s356, %s357
    %p368 = scmp.eq.s32.totalorder %s24, 0
    %p369 = por %p367, %p368
    %p370 = scmp.ne.s32.totalorder %s356, %s357
    %p371 = scmp.eq.s32.totalorder %s25, 3
    %p372 = por %p370, %p371
    %p374 = scmp.ne.s32.totalorder %s357, %s373
    %p375 = scmp.eq.s32.totalorder %s25, 0
    %p376 = por %p374, %p375
    %s377 = ssub.s32 %s26, %s38
    %p378 = scmp.eq.s32.totalorder %s377, 0
    %s380 = sadd.s32 %s379, 1
    %s381 = scalar_select %p378, %s379, %s380
    %p384 = pneg %p378
    %p385 = scmp.eq.s32.totalorder %s19, 3
    %p386 = por %p384, %p385
    %p387 = scmp.ne.s32.totalorder %s379, %s382
    %p388 = scmp.eq.s32.totalorder %s19, 0
    %p389 = por %p387, %p388
    %p390 = scmp.ne.s32.totalorder %s379, %s382
    %p391 = scmp.eq.s32.totalorder %s24, 3
    %p392 = por %p390, %p391
    %p393 = scmp.ne.s32.totalorder %s382, %s383
    %p394 = scmp.eq.s32.totalorder %s24, 0
    %p395 = por %p393, %p394
    %p396 = scmp.ne.s32.totalorder %s382, %s383
    %p397 = scmp.eq.s32.totalorder %s25, 3
    %p398 = por %p396, %p397
    %p400 = scmp.ne.s32.totalorder %s383, %s399
    %p401 = scmp.eq.s32.totalorder %s25, 0
    %p402 = por %p400, %p401
    %p403 = scmp.le.s32.totalorder 1, %s19
    %p404 = scmp.lt.s32.totalorder %s19, 5
    %p405 = pnand %p403, %p404
    %p406 = pneg %p405
    // Predicated region
    $region9: #{vision_transformer_forward.2} parent=5 // pred_check
      _
    $region10: #{vision_transformer_forward.2} parent=5 // pred_check_branch
      %408 = sbr.rel (%p405) target = $region12
    $region11: #{vision_transformer_forward.2} parent=5 // pred_region
      %s409 = ssub.s32 %s19, 1
    $region12: #{vision_transformer_forward.2} parent=5 // pred_fallthru
      _
    %p410 = scmp.lt.s32.totalorder %s19, 4
    // Predicated region
    $region13: #{vision_transformer_forward.2} parent=5 // pred_check
      %p411 = pneg %p410
    $region14: #{vision_transformer_forward.2} parent=5 // pred_check_branch
      %413 = sbr.rel (%p411) target = $region16
    $region15: #{vision_transformer_forward.2} parent=5 // pred_region
      // Predicated region
      $region17: #{vision_transformer_forward.2} parent=15 // pred_check
        %p414 = pneg %p51
      $region18: #{vision_transformer_forward.2} parent=15 // pred_check_branch
        %416 = sbr.rel (%p414) target = $region20
      $region19: #{vision_transformer_forward.2} parent=15 // pred_region
        %p417 = scmp.lt.s32.totalorder %s26, 1
        %s418 = scalar_select %p417, %s26, 1
        %s419 = smul.addr %s418, 8
        %s420 = scalar_lea.vmem %s0, %s419
      $region20: #{vision_transformer_forward.2} parent=15 // pred_fallthru
        _
      // Predicated region
      $region21: #{vision_transformer_forward.2} parent=15 // pred_check
        %p421 = pneg %p77
      $region22: #{vision_transformer_forward.2} parent=15 // pred_check_branch
        %423 = sbr.rel (%p421) target = $region24
      $region23: #{vision_transformer_forward.2} parent=15 // pred_region
        %p424 = scmp.lt.s32.totalorder %s27, 1
        %s425 = scalar_select %p424, %s27, 1
        %s426 = scalar_lea.vmem %s1, %s425
      $region24: #{vision_transformer_forward.2} parent=15 // pred_fallthru
        _
      // Predicated region
      $region25: #{vision_transformer_forward.2} parent=15 // pred_check
        %p427 = pneg %p103
      $region26: #{vision_transformer_forward.2} parent=15 // pred_check_branch
        %429 = sbr.rel (%p427) target = $region28
      $region27: #{vision_transformer_forward.2} parent=15 // pred_region
        %p430 = scmp.lt.s32.totalorder %s27, 1
        %s431 = scalar_select %p430, %s27, 1
        %s432 = scalar_lea.vmem %s2, %s431
      $region28: #{vision_transformer_forward.2} parent=15 // pred_fallthru
        _
      // Predicated region
      $region29: #{vision_transformer_forward.2} parent=15 // pred_check
        %p433 = pneg %p129
      $region30: #{vision_transformer_forward.2} parent=15 // pred_check_branch
        %435 = sbr.rel (%p433) target = $region32
      $region31: #{vision_transformer_forward.2} parent=15 // pred_region
        %p436 = scmp.lt.s32.totalorder %s27, 1
        %s437 = scalar_select %p436, %s27, 1
        %s438 = smul.addr %s437, 4
        %s439 = smul.addr %s438, 4
        %s440 = scalar_lea.vmem %s3, %s439
      $region32: #{vision_transformer_forward.2} parent=15 // pred_fallthru
        _
      // Predicated region
      $region33: #{vision_transformer_forward.2} parent=15 // pred_check
        %p441 = pneg %p155
      $region34: #{vision_transformer_forward.2} parent=15 // pred_check_branch
        %443 = sbr.rel (%p441) target = $region36
      $region35: #{vision_transformer_forward.2} parent=15 // pred_region
        %p444 = scmp.lt.s32.totalorder %s27, 1
        %s445 = scalar_select %p444, %s27, 1
        %s446 = scalar_lea.vmem %s4, %s445
      $region36: #{vision_transformer_forward.2} parent=15 // pred_fallthru
        _
      // Predicated region
      $region37: #{vision_transformer_forward.2} parent=15 // pred_check
        %p447 = pneg %p181
      $region38: #{vision_transformer_forward.2} parent=15 // pred_check_branch
        %449 = sbr.rel (%p447) target = $region40
      $region39: #{vision_transformer_forward.2} parent=15 // pred_region
        %p450 = scmp.lt.s32.totalorder %s27, 1
        %s451 = scalar_select %p450, %s27, 1
        %s452 = smul.addr %s451, 4
        %s453 = smul.addr %s452, 4
        %s454 = scalar_lea.vmem %s5, %s453
      $region40: #{vision_transformer_forward.2} parent=15 // pred_fallthru
        _
      // Predicated region
      $region41: #{vision_transformer_forward.2} parent=15 // pred_check
        %p455 = pneg %p207
      $region42: #{vision_transformer_forward.2} parent=15 // pred_check_branch
        %457 = sbr.rel (%p455) target = $region44
      $region43: #{vision_transformer_forward.2} parent=15 // pred_region
        %p458 = scmp.lt.s32.totalorder %s27, 1
        %s459 = scalar_select %p458, %s27, 1
        %s460 = scalar_lea.vmem %s6, %s459
      $region44: #{vision_transformer_forward.2} parent=15 // pred_fallthru
        _
      // Predicated region
      $region45: #{vision_transformer_forward.2} parent=15 // pred_check
        %p461 = pneg %p233
      $region46: #{vision_transformer_forward.2} parent=15 // pred_check_branch
        %463 = sbr.rel (%p461) target = $region48
      $region47: #{vision_transformer_forward.2} parent=15 // pred_region
        %p464 = scmp.lt.s32.totalorder %s27, 1
        %s465 = scalar_select %p464, %s27, 1
        %s466 = scalar_lea.vmem %s7, %s465
      $region48: #{vision_transformer_forward.2} parent=15 // pred_fallthru
        _
      // Predicated region
      $region49: #{vision_transformer_forward.2} parent=15 // pred_check
        %p467 = pneg %p259
      $region50: #{vision_transformer_forward.2} parent=15 // pred_check_branch
        %469 = sbr.rel (%p467) target = $region52
      $region51: #{vision_transformer_forward.2} parent=15 // pred_region
        %p470 = scmp.lt.s32.totalorder %s27, 1
        %s471 = scalar_select %p470, %s27, 1
        %s472 = scalar_lea.vmem %s8, %s471
      $region52: #{vision_transformer_forward.2} parent=15 // pred_fallthru
        _
      // Predicated region
      $region53: #{vision_transformer_forward.2} parent=15 // pred_check
        %p473 = pneg %p285
      $region54: #{vision_transformer_forward.2} parent=15 // pred_check_branch
        %475 = sbr.rel (%p473) target = $region56
      $region55: #{vision_transformer_forward.2} parent=15 // pred_region
        %p476 = scmp.lt.s32.totalorder %s27, 1
        %s477 = scalar_select %p476, %s27, 1
        %s478 = smul.addr %s477, 4
        %s479 = smul.addr %s478, 4
        %s480 = scalar_lea.vmem %s9, %s479
      $region56: #{vision_transformer_forward.2} parent=15 // pred_fallthru
        _
      // Predicated region
      $region57: #{vision_transformer_forward.2} parent=15 // pred_check
        %p481 = pneg %p311
      $region58: #{vision_transformer_forward.2} parent=15 // pred_check_branch
        %483 = sbr.rel (%p481) target = $region60
      $region59: #{vision_transformer_forward.2} parent=15 // pred_region
        %p484 = scmp.lt.s32.totalorder %s27, 1
        %s485 = scalar_select %p484, %s27, 1
        %s486 = scalar_lea.vmem %s10, %s485
      $region60: #{vision_transformer_forward.2} parent=15 // pred_fallthru
        _
      // Predicated region
      $region61: #{vision_transformer_forward.2} parent=15 // pred_check
        %p487 = pneg %p337
      $region62: #{vision_transformer_forward.2} parent=15 // pred_check_branch
        %489 = sbr.rel (%p487) target = $region64
      $region63: #{vision_transformer_forward.2} parent=15 // pred_region
        %p490 = scmp.lt.s32.totalorder %s27, 1
        %s491 = scalar_select %p490, %s27, 1
        %s492 = smul.addr %s491, 8
        %s493 = smul.addr %s492, 4
        %s494 = scalar_lea.vmem %s11, %s493
      $region64: #{vision_transformer_forward.2} parent=15 // pred_fallthru
        _
      // Predicated region
      $region65: #{vision_transformer_forward.2} parent=15 // pred_check
        %p495 = pneg %p363
      $region66: #{vision_transformer_forward.2} parent=15 // pred_check_branch
        %497 = sbr.rel (%p495) target = $region68
      $region67: #{vision_transformer_forward.2} parent=15 // pred_region
        %p498 = scmp.lt.s32.totalorder %s27, 1
        %s499 = scalar_select %p498, %s27, 1
        %s500 = scalar_lea.vmem %s12, %s499
      $region68: #{vision_transformer_forward.2} parent=15 // pred_fallthru
        _
    $region16: #{vision_transformer_forward.2} parent=5 // pred_fallthru
      _
    %p501 = scmp.le.s32.totalorder 1, %s19
    %p502 = scmp.lt.s32.totalorder %s19, 5
    %p503 = pnand %p501, %p502
    %p504 = pneg %p503
    // Predicated region
    $region69: #{vision_transformer_forward.2} parent=5 // pred_check
      _
    $region70: #{vision_transformer_forward.2} parent=5 // pred_check_branch
      %506 = sbr.rel (%p503) target = $region72
    $region71: #{vision_transformer_forward.2} parent=5 // pred_region
      %s507 = ssub.s32 %s19, 1
      %p508 = scmp.lt.s32.totalorder %s28, 1
      %s509 = scalar_select %p508, %s28, 1
      %s510 = smul.addr %s509, 8
      %s511 = scalar_lea.vmem %s0, %s510
      %p512 = pneg %p57
      %p513 = pneg %p54
      %p514 = scmp.lt.s32.totalorder %s29, 1
      %s515 = scalar_select %p514, %s29, 1
      %s516 = scalar_lea.vmem %s1, %s515
      %p517 = pneg %p83
      %p518 = pneg %p80
      %p519 = scmp.lt.s32.totalorder %s29, 1
      %s520 = scalar_select %p519, %s29, 1
      %s521 = scalar_lea.vmem %s2, %s520
      %p522 = pneg %p109
      %p523 = pneg %p106
      %p524 = scmp.lt.s32.totalorder %s29, 1
      %s525 = scalar_select %p524, %s29, 1
      %s526 = smul.addr %s525, 4
      %s527 = smul.addr %s526, 4
      %s528 = scalar_lea.vmem %s3, %s527
      %p529 = pneg %p135
      %p530 = pneg %p132
      %p531 = scmp.lt.s32.totalorder %s29, 1
      %s532 = scalar_select %p531, %s29, 1
      %s533 = scalar_lea.vmem %s4, %s532
      %p534 = pneg %p161
      %p535 = pneg %p158
      %p536 = scmp.lt.s32.totalorder %s29, 1
      %s537 = scalar_select %p536, %s29, 1
      %s538 = smul.addr %s537, 4
      %s539 = smul.addr %s538, 4
      %s540 = scalar_lea.vmem %s5, %s539
      %p541 = pneg %p187
      %p542 = pneg %p184
      %p543 = scmp.lt.s32.totalorder %s29, 1
      %s544 = scalar_select %p543, %s29, 1
      %s545 = scalar_lea.vmem %s6, %s544
      %p546 = pneg %p213
      %p547 = pneg %p210
      %p548 = scmp.lt.s32.totalorder %s29, 1
      %s549 = scalar_select %p548, %s29, 1
      %s550 = scalar_lea.vmem %s7, %s549
      %p551 = pneg %p239
      %p552 = pneg %p236
      %p553 = scmp.lt.s32.totalorder %s29, 1
      %s554 = scalar_select %p553, %s29, 1
      %s555 = scalar_lea.vmem %s8, %s554
      %p556 = pneg %p265
      %p557 = pneg %p262
      %p558 = scmp.lt.s32.totalorder %s29, 1
      %s559 = scalar_select %p558, %s29, 1
      %s560 = smul.addr %s559, 4
      %s561 = smul.addr %s560, 4
      %s562 = scalar_lea.vmem %s9, %s561
      %p563 = pneg %p291
      %p564 = pneg %p288
      %p565 = scmp.lt.s32.totalorder %s29, 1
      %s566 = scalar_select %p565, %s29, 1
      %s567 = scalar_lea.vmem %s10, %s566
      %p568 = pneg %p317
      %p569 = pneg %p314
      %p570 = scmp.lt.s32.totalorder %s29, 1
      %s571 = scalar_select %p570, %s29, 1
      %s572 = smul.addr %s571, 8
      %s573 = smul.addr %s572, 4
      %s574 = scalar_lea.vmem %s11, %s573
      %p575 = pneg %p343
      %p576 = pneg %p340
      %p577 = scmp.lt.s32.totalorder %s29, 1
      %s578 = scalar_select %p577, %s29, 1
      %s579 = scalar_lea.vmem %s12, %s578
      %p580 = pneg %p369
      %p581 = pneg %p366
      %p582 = pneg %p395
      %p583 = pneg %p392
      %p584 = scmp.lt.s32.totalorder %s28, 1
      %s585 = scalar_select %p584, %s28, 1
      %s586 = smul.addr %s585, 4
      %s587 = scalar_lea.vmem %s13, %s586
      %p588 = scmp.lt.s32.totalorder %s28, 1
      %s589 = scalar_select %p588, %s28, 1
      %s590 = smul.addr %s589, 8
      %s591 = scalar_lea.vmem %s0, %s590
      %p592 = scmp.lt.s32.totalorder %s29, 1
      %s593 = scalar_select %p592, %s29, 1
      %s594 = scalar_lea.vmem %s1, %s593
      %p595 = scmp.lt.s32.totalorder %s29, 1
      %s596 = scalar_select %p595, %s29, 1
      %s597 = scalar_lea.vmem %s2, %s596
      %p598 = scmp.lt.s32.totalorder %s29, 1
      %s599 = scalar_select %p598, %s29, 1
      %s600 = smul.addr %s599, 4
      %s601 = smul.addr %s600, 4
      %s602 = scalar_lea.vmem %s3, %s601
      %p603 = scmp.lt.s32.totalorder %s29, 1
      %s604 = scalar_select %p603, %s29, 1
      %s605 = scalar_lea.vmem %s4, %s604
      %p606 = scmp.lt.s32.totalorder %s29, 1
      %s607 = scalar_select %p606, %s29, 1
      %s608 = smul.addr %s607, 4
      %s609 = smul.addr %s608, 4
      %s610 = scalar_lea.vmem %s5, %s609
      %p611 = scmp.lt.s32.totalorder %s29, 1
      %s612 = scalar_select %p611, %s29, 1
      %s613 = scalar_lea.vmem %s6, %s612
      %p614 = scmp.lt.s32.totalorder %s29, 1
      %s615 = scalar_select %p614, %s29, 1
      %s616 = scalar_lea.vmem %s7, %s615
      %p617 = scmp.lt.s32.totalorder %s29, 1
      %s618 = scalar_select %p617, %s29, 1
      %s619 = scalar_lea.vmem %s8, %s618
      %p620 = scmp.lt.s32.totalorder %s29, 1
      %s621 = scalar_select %p620, %s29, 1
      %s622 = smul.addr %s621, 4
      %s623 = smul.addr %s622, 4
      %s624 = scalar_lea.vmem %s9, %s623
      %p625 = scmp.lt.s32.totalorder %s29, 1
      %s626 = scalar_select %p625, %s29, 1
      %s627 = scalar_lea.vmem %s10, %s626
      %p628 = scmp.lt.s32.totalorder %s29, 1
      %s629 = scalar_select %p628, %s29, 1
      %s630 = smul.addr %s629, 8
      %s631 = smul.addr %s630, 4
      %s632 = scalar_lea.vmem %s11, %s631
      %p633 = scmp.lt.s32.totalorder %s29, 1
      %s634 = scalar_select %p633, %s29, 1
      %s635 = scalar_lea.vmem %s12, %s634
      %p636 = scmp.lt.s32.totalorder %s28, 1
      %s637 = scalar_select %p636, %s28, 1
      %s638 = smul.addr %s637, 4
      %s639 = scalar_lea.vmem %s13, %s638
      %p641 = scmp.eq.s32.totalorder %s29, 0
      // Predicated region
      $region73: #{vision_transformer_forward.2} parent=71 // pred_check
        %p642 = pneg %p641
      $region74: #{vision_transformer_forward.2} parent=71 // pred_check_branch
        %644 = sbr.rel (%p642) target = $region76
      $region75: #{vision_transformer_forward.2} parent=71 // pred_region
        %v645 = vld [vmem:[%s591] sm:$0xff]
        %vm646 = vcmask 261120
        %647 = vst.msk [vmem:[#allocation2] sm:$0xff] %vm646, %v645
      $region76: #{vision_transformer_forward.2} parent=71 // pred_fallthru
        _
      %v648 = vld [vmem:[#allocation2] sm:$0xff]
      %v649 = vld [vmem:[%s594] sm:$0x1]
      %v650 = vld [vmem:[%s597] sm:$0x1]
      %vm651 = vcmask 261120
      %v652 = vsel %vm651, %v648, 0.0
      %653 = vadd.xlane.f32.xlu0 %v652
      %v654 = vpop.xlane.xlu0 %653
      %v655 = vrcp.pop 32.0
      %v656 = vmul.f32 %v654, %v655
      %v657 = vmul.f32 %v648, %v648
      %v658 = vsel %vm651, %v657, 0.0
      %659 = vadd.xlane.f32.xlu0 %v658
      %v660 = vpop.xlane.xlu0 %659
      %v661 = vmul.f32 %v660, %v655
      %v662 = vmul.f32 %v656, %v656
      %v663 = vsub.f32 %v661, %v662
      %v664 = vsub.f32 %v648, %v656
      %v665 = vadd.f32 %v663, 1e-05
      %v666 = vrsqrt.pop %v665
      %v667 = vmul.f32 %v664, %v666
      %v669 = vlaneseq
      %v670 = vshrl.u32 %v669, 7
      %v671 = vsub.s32 0, %v670
      %v672 = vrot.slane %v649, %v671
      %v674 = vmul.f32 %v667, %v672
      %v676 = vlaneseq
      %v677 = vshrl.u32 %v676, 7
      %v678 = vsub.s32 0, %v677
      %v679 = vrot.slane %v650, %v678
      %v681 = vadd.f32 %v674, %v679
      %v682 = vpack.c.bf16 %v681, %v681
      %v683 = vld [vmem:[%s602] sm:$0xf]
      %v684 = vld [vmem:[%s602 + $0x4] sm:$0xf]
      %v685 = vld [vmem:[%s602 + $0x8] sm:$0xf]
      %v686 = vld [vmem:[%s602 + $0xc] sm:$0xf]
      %v687 = vld [vmem:[%s605] sm:$0x1]
      %v689 = vlaneseq
      %v690 = vshrl.u32 %v689, 7
      %v691 = vsub.s32 0, %v690
      %v692 = vrot.slane %v687, %v691
      %v698 = vunpack.c.l.b16 %v683
      %v699 = vunpack.c.l.b16 %v684
      %v700 = vunpack.c.l.b16 %v685
      %v701 = vunpack.c.l.b16 %v686
      %v702 = vpack.c.b16 %v699, %v698
      %v703 = vpack.c.b16 %v701, %v700
      %v707 = vsel %vm651, %v682, 0
      %709 = vmatprep.subr.bf16.mxu0 0
      %710 = vmatpush1.bf16.msra.mxu0 %v702
      %711 = vmatprep.subr.bf16.mxu0 0
      %712 = vmatpush1.bf16.msra.mxu0 %v703
      %713 = vmatprep.subr.bf16.mxu0 0
      %714 = vmatpush1.bf16.msra.mxu0 0
      %715 = vmatprep.subr.bf16.mxu0 0
      %716 = vmatpush1.bf16.msra.mxu0 0
      %717 = vmatprep.subr.bf16.mxu0 0
      %718 = vmatpush1.bf16.msra.mxu0 0
      %719 = vmatprep.subr.bf16.mxu0 0
      %720 = vmatpush1.bf16.msra.mxu0 0
      %721 = vmatprep.subr.bf16.mxu0 0
      %722 = vmatpush1.bf16.msra.mxu0 0
      %723 = vmatprep.subr.bf16.mxu0 0
      %724 = vmatpush1.bf16.msra.mxu0 0
      %725 = vmatprep.subr.bf16.mxu0 0
      %726 = vmatpush1.bf16.msra.mxu0 0
      %727 = vmatprep.subr.bf16.mxu0 0
      %728 = vmatpush1.bf16.msra.mxu0 0
      %729 = vmatprep.subr.bf16.mxu0 0
      %730 = vmatpush1.bf16.msra.mxu0 0
      %731 = vmatprep.subr.bf16.mxu0 0
      %732 = vmatpush1.bf16.msra.mxu0 0
      %733 = vmatprep.subr.bf16.mxu0 0
      %734 = vmatpush1.bf16.msra.mxu0 0
      %735 = vmatprep.subr.bf16.mxu0 0
      %736 = vmatpush1.bf16.msra.mxu0 0
      %737 = vmatprep.subr.bf16.mxu0 0
      %738 = vmatpush1.bf16.msra.mxu0 0
      %739 = vmatprep.subr.bf16.mxu0 0
      %740 = vmatpush1.bf16.msra.mxu0 0
      %741 = vmatprep.mubr.bf16.mxu0 0
      %742 = vmatmul.mubr.bf16.gmra.mrb[0].mxu0 %v707
      %v743 = vpop.f32.mrb[0].mxu0
      %v744 = vadd.f32 %v692, %v743
      %v745 = vpop.f32.mrb[0].mxu0
      %v746 = vpop.f32.mrb[0].mxu0
      %v747 = vpop.f32.mrb[0].mxu0
      %748 = vdwg.mxu0
      %750 = vrot.lane.b32.xlu0 %v744, 120
      %v751 = vpop.permute.xlu0 %750
      %753 = vrot.lane.b32.xlu0 %v744, 112
      %v754 = vpop.permute.xlu0 %753
      %756 = vrot.lane.b32.xlu0 %v744, 104
      %v757 = vpop.permute.xlu0 %756
      %v759 = vcombine.low %v744, %v754
      %v760 = vcombine.high %v744, %v754
      %v762 = vunpack.c.l.s4 1983009808
      %v763 = vunpack.c.0.s8 %v762
      %v764 = vlaneseq
      %v765 = vshrl.u32 %v764, 7
      %v766 = vsub.s32 %v763, %v765
      %v767 = vrot.slane %v759, %v766
      %v769 = vunpack.c.l.s4 1983009808
      %v770 = vunpack.c.0.s8 %v769
      %v771 = vlaneseq
      %v772 = vshrl.u32 %v771, 7
      %v773 = vsub.s32 %v770, %v772
      %v774 = vrot.slane %v760, %v773
      %v775 = vcombine.low %v751, %v757
      %v776 = vcombine.high %v751, %v757
      %v778 = vunpack.c.l.s4 1983009808
      %v779 = vunpack.c.0.s8 %v778
      %v780 = vlaneseq
      %v781 = vshrl.u32 %v780, 7
      %v782 = vsub.s32 %v779, %v781
      %v783 = vrot.slane %v775, %v782
      %v785 = vunpack.c.l.s4 1983009808
      %v786 = vunpack.c.0.s8 %v785
      %v787 = vlaneseq
      %v788 = vshrl.u32 %v787, 7
      %v789 = vsub.s32 %v786, %v788
      %v790 = vrot.slane %v776, %v789
      %v791 = vcombine.low %v767, %v783
      %v792 = vcombine.high %v767, %v783
      %v794 = vunpack.c.l.s4 1934713408
      %v795 = vunpack.c.0.s8 %v794
      %v796 = vlaneseq
      %v797 = vshrl.u32 %v796, 7
      %v798 = vsub.s32 %v795, %v797
      %v799 = vrot.slane %v791, %v798
      %v801 = vunpack.c.l.s4 1934713408
      %v802 = vunpack.c.0.s8 %v801
      %v803 = vlaneseq
      %v804 = vshrl.u32 %v803, 7
      %v805 = vsub.s32 %v802, %v804
      %v806 = vrot.slane %v792, %v805
      %v807 = vcombine.low %v774, %v790
      %v808 = vcombine.high %v774, %v790
      %v810 = vunpack.c.l.s4 1934713408
      %v811 = vunpack.c.0.s8 %v810
      %v812 = vlaneseq
      %v813 = vshrl.u32 %v812, 7
      %v814 = vsub.s32 %v811, %v813
      %v815 = vrot.slane %v807, %v814
      %v817 = vunpack.c.l.s4 1934713408
      %v818 = vunpack.c.0.s8 %v817
      %v819 = vlaneseq
      %v820 = vshrl.u32 %v819, 7
      %v821 = vsub.s32 %v818, %v820
      %v822 = vrot.slane %v808, %v821
      %v823 = vcombine.high %v799, 0.0
      %v824 = vcombine.high %v806, 0.0
      %v825 = vcombine.high %v815, 0.0
      %v826 = vcombine.high %v822, 0.0
      %v827 = vcombine.low %v799, %v806
      %v829 = vunpack.c.l.s4 1983009808
      %v830 = vunpack.c.0.s8 %v829
      %v831 = vlaneseq
      %v832 = vshrl.u32 %v831, 7
      %v833 = vsub.s32 %v830, %v832
      %v834 = vrot.slane %v827, %v833
      %v835 = vcombine.low %v823, %v824
      %v837 = vunpack.c.l.s4 1983009808
      %v838 = vunpack.c.0.s8 %v837
      %v839 = vlaneseq
      %v840 = vshrl.u32 %v839, 7
      %v841 = vsub.s32 %v838, %v840
      %v842 = vrot.slane %v835, %v841
      %v843 = vcombine.low %v815, %v822
      %v845 = vunpack.c.l.s4 1983009808
      %v846 = vunpack.c.0.s8 %v845
      %v847 = vlaneseq
      %v848 = vshrl.u32 %v847, 7
      %v849 = vsub.s32 %v846, %v848
      %v850 = vrot.slane %v843, %v849
      %v851 = vcombine.low %v825, %v826
      %v853 = vunpack.c.l.s4 1983009808
      %v854 = vunpack.c.0.s8 %v853
      %v855 = vlaneseq
      %v856 = vshrl.u32 %v855, 7
      %v857 = vsub.s32 %v854, %v856
      %v858 = vrot.slane %v851, %v857
      %v859 = vcombine.low %v834, %v842
      %v860 = vcombine.high %v834, %v842
      %v862 = vunpack.c.l.s4 1934713408
      %v863 = vunpack.c.0.s8 %v862
      %v864 = vlaneseq
      %v865 = vshrl.u32 %v864, 7
      %v866 = vsub.s32 %v863, %v865
      %v867 = vrot.slane %v859, %v866
      %v869 = vunpack.c.l.s4 1934713408
      %v870 = vunpack.c.0.s8 %v869
      %v871 = vlaneseq
      %v872 = vshrl.u32 %v871, 7
      %v873 = vsub.s32 %v870, %v872
      %v874 = vrot.slane %v860, %v873
      %v875 = vcombine.low %v850, %v858
      %v876 = vcombine.high %v850, %v858
      %v878 = vunpack.c.l.s4 1934713408
      %v879 = vunpack.c.0.s8 %v878
      %v880 = vlaneseq
      %v881 = vshrl.u32 %v880, 7
      %v882 = vsub.s32 %v879, %v881
      %v883 = vrot.slane %v875, %v882
      %v885 = vunpack.c.l.s4 1934713408
      %v886 = vunpack.c.0.s8 %v885
      %v887 = vlaneseq
      %v888 = vshrl.u32 %v887, 7
      %v889 = vsub.s32 %v886, %v888
      %v890 = vrot.slane %v876, %v889
      %v891 = vcombine.low %v867, %v883
      %v892 = vcombine.high %v867, %v883
      %v893 = vcombine.low %v874, %v890
      %v894 = vcombine.high %v874, %v890
      %895 = vrot.lane.b32.xlu0 %v744, 96
      %v896 = vpop.permute.xlu0 %895
      %897 = vrot.lane.b32.xlu0 %v751, 96
      %v898 = vpop.permute.xlu0 %897
      %899 = vrot.lane.b32.xlu0 %v754, 96
      %v900 = vpop.permute.xlu0 %899
      %901 = vrot.lane.b32.xlu0 %v757, 96
      %v902 = vpop.permute.xlu0 %901
      %v907 = vcombine.low %v896, %v900
      %v908 = vcombine.high %v896, %v900
      %v910 = vunpack.c.l.s4 1983009808
      %v911 = vunpack.c.0.s8 %v910
      %v912 = vlaneseq
      %v913 = vshrl.u32 %v912, 7
      %v914 = vsub.s32 %v911, %v913
      %v915 = vrot.slane %v907, %v914
      %v917 = vunpack.c.l.s4 1983009808
      %v918 = vunpack.c.0.s8 %v917
      %v919 = vlaneseq
      %v920 = vshrl.u32 %v919, 7
      %v921 = vsub.s32 %v918, %v920
      %v922 = vrot.slane %v908, %v921
      %v923 = vcombine.low %v898, %v902
      %v924 = vcombine.high %v898, %v902
      %v926 = vunpack.c.l.s4 1983009808
      %v927 = vunpack.c.0.s8 %v926
      %v928 = vlaneseq
      %v929 = vshrl.u32 %v928, 7
      %v930 = vsub.s32 %v927, %v929
      %v931 = vrot.slane %v923, %v930
      %v933 = vunpack.c.l.s4 1983009808
      %v934 = vunpack.c.0.s8 %v933
      %v935 = vlaneseq
      %v936 = vshrl.u32 %v935, 7
      %v937 = vsub.s32 %v934, %v936
      %v938 = vrot.slane %v924, %v937
      %v939 = vcombine.low %v915, %v931
      %v940 = vcombine.high %v915, %v931
      %v942 = vunpack.c.l.s4 1934713408
      %v943 = vunpack.c.0.s8 %v942
      %v944 = vlaneseq
      %v945 = vshrl.u32 %v944, 7
      %v946 = vsub.s32 %v943, %v945
      %v947 = vrot.slane %v939, %v946
      %v949 = vunpack.c.l.s4 1934713408
      %v950 = vunpack.c.0.s8 %v949
      %v951 = vlaneseq
      %v952 = vshrl.u32 %v951, 7
      %v953 = vsub.s32 %v950, %v952
      %v954 = vrot.slane %v940, %v953
      %v955 = vcombine.low %v922, %v938
      %v956 = vcombine.high %v922, %v938
      %v958 = vunpack.c.l.s4 1934713408
      %v959 = vunpack.c.0.s8 %v958
      %v960 = vlaneseq
      %v961 = vshrl.u32 %v960, 7
      %v962 = vsub.s32 %v959, %v961
      %v963 = vrot.slane %v955, %v962
      %v965 = vunpack.c.l.s4 1934713408
      %v966 = vunpack.c.0.s8 %v965
      %v967 = vlaneseq
      %v968 = vshrl.u32 %v967, 7
      %v969 = vsub.s32 %v966, %v968
      %v970 = vrot.slane %v956, %v969
      %v971 = vcombine.high %v947, 0.0
      %v972 = vcombine.high %v954, 0.0
      %v973 = vcombine.high %v963, 0.0
      %v974 = vcombine.high %v970, 0.0
      %v975 = vcombine.low %v947, %v954
      %v977 = vunpack.c.l.s4 1983009808
      %v978 = vunpack.c.0.s8 %v977
      %v979 = vlaneseq
      %v980 = vshrl.u32 %v979, 7
      %v981 = vsub.s32 %v978, %v980
      %v982 = vrot.slane %v975, %v981
      %v983 = vcombine.low %v971, %v972
      %v985 = vunpack.c.l.s4 1983009808
      %v986 = vunpack.c.0.s8 %v985
      %v987 = vlaneseq
      %v988 = vshrl.u32 %v987, 7
      %v989 = vsub.s32 %v986, %v988
      %v990 = vrot.slane %v983, %v989
      %v991 = vcombine.low %v963, %v970
      %v993 = vunpack.c.l.s4 1983009808
      %v994 = vunpack.c.0.s8 %v993
      %v995 = vlaneseq
      %v996 = vshrl.u32 %v995, 7
      %v997 = vsub.s32 %v994, %v996
      %v998 = vrot.slane %v991, %v997
      %v999 = vcombine.low %v973, %v974
      %v1001 = vunpack.c.l.s4 1983009808
      %v1002 = vunpack.c.0.s8 %v1001
      %v1003 = vlaneseq
      %v1004 = vshrl.u32 %v1003, 7
      %v1005 = vsub.s32 %v1002, %v1004
      %v1006 = vrot.slane %v999, %v1005
      %v1007 = vcombine.low %v982, %v990
      %v1008 = vcombine.high %v982, %v990
      %v1010 = vunpack.c.l.s4 1934713408
      %v1011 = vunpack.c.0.s8 %v1010
      %v1012 = vlaneseq
      %v1013 = vshrl.u32 %v1012, 7
      %v1014 = vsub.s32 %v1011, %v1013
      %v1015 = vrot.slane %v1007, %v1014
      %v1017 = vunpack.c.l.s4 1934713408
      %v1018 = vunpack.c.0.s8 %v1017
      %v1019 = vlaneseq
      %v1020 = vshrl.u32 %v1019, 7
      %v1021 = vsub.s32 %v1018, %v1020
      %v1022 = vrot.slane %v1008, %v1021
      %v1023 = vcombine.low %v998, %v1006
      %v1024 = vcombine.high %v998, %v1006
      %v1026 = vunpack.c.l.s4 1934713408
      %v1027 = vunpack.c.0.s8 %v1026
      %v1028 = vlaneseq
      %v1029 = vshrl.u32 %v1028, 7
      %v1030 = vsub.s32 %v1027, %v1029
      %v1031 = vrot.slane %v1023, %v1030
      %v1033 = vunpack.c.l.s4 1934713408
      %v1034 = vunpack.c.0.s8 %v1033
      %v1035 = vlaneseq
      %v1036 = vshrl.u32 %v1035, 7
      %v1037 = vsub.s32 %v1034, %v1036
      %v1038 = vrot.slane %v1024, %v1037
      %v1039 = vcombine.low %v1015, %v1031
      %v1040 = vcombine.high %v1015, %v1031
      %v1041 = vcombine.low %v1022, %v1038
      %v1042 = vcombine.high %v1022, %v1038
      %1043 = vrot.lane.b32.xlu0 %v744, 64
      %v1044 = vpop.permute.xlu0 %1043
      %1045 = vrot.lane.b32.xlu0 %v751, 64
      %v1046 = vpop.permute.xlu0 %1045
      %1047 = vrot.lane.b32.xlu0 %v754, 64
      %v1048 = vpop.permute.xlu0 %1047
      %1049 = vrot.lane.b32.xlu0 %v757, 64
      %v1050 = vpop.permute.xlu0 %1049
      %v1055 = vcombine.low %v1044, %v1048
      %v1056 = vcombine.high %v1044, %v1048
      %v1058 = vunpack.c.l.s4 1983009808
      %v1059 = vunpack.c.0.s8 %v1058
      %v1060 = vlaneseq
      %v1061 = vshrl.u32 %v1060, 7
      %v1062 = vsub.s32 %v1059, %v1061
      %v1063 = vrot.slane %v1055, %v1062
      %v1065 = vunpack.c.l.s4 1983009808
      %v1066 = vunpack.c.0.s8 %v1065
      %v1067 = vlaneseq
      %v1068 = vshrl.u32 %v1067, 7
      %v1069 = vsub.s32 %v1066, %v1068
      %v1070 = vrot.slane %v1056, %v1069
      %v1071 = vcombine.low %v1046, %v1050
      %v1072 = vcombine.high %v1046, %v1050
      %v1074 = vunpack.c.l.s4 1983009808
      %v1075 = vunpack.c.0.s8 %v1074
      %v1076 = vlaneseq
      %v1077 = vshrl.u32 %v1076, 7
      %v1078 = vsub.s32 %v1075, %v1077
      %v1079 = vrot.slane %v1071, %v1078
      %v1081 = vunpack.c.l.s4 1983009808
      %v1082 = vunpack.c.0.s8 %v1081
      %v1083 = vlaneseq
      %v1084 = vshrl.u32 %v1083, 7
      %v1085 = vsub.s32 %v1082, %v1084
      %v1086 = vrot.slane %v1072, %v1085
      %v1087 = vcombine.low %v1063, %v1079
      %v1088 = vcombine.high %v1063, %v1079
      %v1090 = vunpack.c.l.s4 1934713408
      %v1091 = vunpack.c.0.s8 %v1090
      %v1092 = vlaneseq
      %v1093 = vshrl.u32 %v1092, 7
      %v1094 = vsub.s32 %v1091, %v1093
      %v1095 = vrot.slane %v1087, %v1094
      %v1097 = vunpack.c.l.s4 1934713408
      %v1098 = vunpack.c.0.s8 %v1097
      %v1099 = vlaneseq
      %v1100 = vshrl.u32 %v1099, 7
      %v1101 = vsub.s32 %v1098, %v1100
      %v1102 = vrot.slane %v1088, %v1101
      %v1103 = vcombine.low %v1070, %v1086
      %v1104 = vcombine.high %v1070, %v1086
      %v1106 = vunpack.c.l.s4 1934713408
      %v1107 = vunpack.c.0.s8 %v1106
      %v1108 = vlaneseq
      %v1109 = vshrl.u32 %v1108, 7
      %v1110 = vsub.s32 %v1107, %v1109
      %v1111 = vrot.slane %v1103, %v1110
      %v1113 = vunpack.c.l.s4 1934713408
      %v1114 = vunpack.c.0.s8 %v1113
      %v1115 = vlaneseq
      %v1116 = vshrl.u32 %v1115, 7
      %v1117 = vsub.s32 %v1114, %v1116
      %v1118 = vrot.slane %v1104, %v1117
      %v1119 = vcombine.high %v1095, 0.0
      %v1120 = vcombine.high %v1102, 0.0
      %v1121 = vcombine.high %v1111, 0.0
      %v1122 = vcombine.high %v1118, 0.0
      %v1123 = vcombine.low %v1095, %v1102
      %v1125 = vunpack.c.l.s4 1983009808
      %v1126 = vunpack.c.0.s8 %v1125
      %v1127 = vlaneseq
      %v1128 = vshrl.u32 %v1127, 7
      %v1129 = vsub.s32 %v1126, %v1128
      %v1130 = vrot.slane %v1123, %v1129
      %v1131 = vcombine.low %v1119, %v1120
      %v1133 = vunpack.c.l.s4 1983009808
      %v1134 = vunpack.c.0.s8 %v1133
      %v1135 = vlaneseq
      %v1136 = vshrl.u32 %v1135, 7
      %v1137 = vsub.s32 %v1134, %v1136
      %v1138 = vrot.slane %v1131, %v1137
      %v1139 = vcombine.low %v1111, %v1118
      %v1141 = vunpack.c.l.s4 1983009808
      %v1142 = vunpack.c.0.s8 %v1141
      %v1143 = vlaneseq
      %v1144 = vshrl.u32 %v1143, 7
      %v1145 = vsub.s32 %v1142, %v1144
      %v1146 = vrot.slane %v1139, %v1145
      %v1147 = vcombine.low %v1121, %v1122
      %v1149 = vunpack.c.l.s4 1983009808
      %v1150 = vunpack.c.0.s8 %v1149
      %v1151 = vlaneseq
      %v1152 = vshrl.u32 %v1151, 7
      %v1153 = vsub.s32 %v1150, %v1152
      %v1154 = vrot.slane %v1147, %v1153
      %v1155 = vcombine.low %v1130, %v1138
      %v1156 = vcombine.high %v1130, %v1138
      %v1158 = vunpack.c.l.s4 1934713408
      %v1159 = vunpack.c.0.s8 %v1158
      %v1160 = vlaneseq
      %v1161 = vshrl.u32 %v1160, 7
      %v1162 = vsub.s32 %v1159, %v1161
      %v1163 = vrot.slane %v1155, %v1162
      %v1165 = vunpack.c.l.s4 1934713408
      %v1166 = vunpack.c.0.s8 %v1165
      %v1167 = vlaneseq
      %v1168 = vshrl.u32 %v1167, 7
      %v1169 = vsub.s32 %v1166, %v1168
      %v1170 = vrot.slane %v1156, %v1169
      %v1171 = vcombine.low %v1146, %v1154
      %v1172 = vcombine.high %v1146, %v1154
      %v1174 = vunpack.c.l.s4 1934713408
      %v1175 = vunpack.c.0.s8 %v1174
      %v1176 = vlaneseq
      %v1177 = vshrl.u32 %v1176, 7
      %v1178 = vsub.s32 %v1175, %v1177
      %v1179 = vrot.slane %v1171, %v1178
      %v1181 = vunpack.c.l.s4 1934713408
      %v1182 = vunpack.c.0.s8 %v1181
      %v1183 = vlaneseq
      %v1184 = vshrl.u32 %v1183, 7
      %v1185 = vsub.s32 %v1182, %v1184
      %v1186 = vrot.slane %v1172, %v1185
      %v1187 = vcombine.low %v1163, %v1179
      %v1188 = vcombine.high %v1163, %v1179
      %v1189 = vcombine.low %v1170, %v1186
      %v1190 = vcombine.high %v1170, %v1186
      %v1191 = vpack.c.bf16 %v891, %v891
      %v1192 = vpack.c.bf16 %v892, %v892
      %v1193 = vpack.c.bf16 %v893, %v893
      %v1194 = vpack.c.bf16 %v894, %v894
      %v1195 = vpack.c.bf16 %v1039, %v1039
      %v1196 = vpack.c.bf16 %v1040, %v1040
      %v1197 = vpack.c.bf16 %v1041, %v1041
      %v1198 = vpack.c.bf16 %v1042, %v1042
      %vm1199 = vcmask 64512
      %v1201 = vsel %vm1199, %v1191, 0
      %v1204 = vsel %vm1199, %v1195, 0
      %1206 = vmatprep.subr.bf16.mxu0 0
      %1207 = vmatpush1.bf16.xpose.msra.mxu0 %v1204
      %1208 = vmatprep.subr.bf16.mxu0 0
      %1209 = vmatpush1.bf16.xpose.msra.mxu0 0
      %1210 = vmatprep.subr.bf16.mxu0 0
      %1211 = vmatpush1.bf16.xpose.msra.mxu0 0
      %1212 = vmatprep.subr.bf16.mxu0 0
      %1213 = vmatpush1.bf16.xpose.msra.mxu0 0
      %1214 = vmatprep.subr.bf16.mxu0 0
      %1215 = vmatpush1.bf16.xpose.msra.mxu0 0
      %1216 = vmatprep.subr.bf16.mxu0 0
      %1217 = vmatpush1.bf16.xpose.msra.mxu0 0
      %1218 = vmatprep.subr.bf16.mxu0 0
      %1219 = vmatpush1.bf16.xpose.msra.mxu0 0
      %1220 = vmatprep.subr.bf16.mxu0 0
      %1221 = vmatpush1.bf16.xpose.msra.mxu0 0
      %1222 = vmatprep.subr.bf16.mxu0 0
      %1223 = vmatpush1.bf16.xpose.msra.mxu0 0
      %1224 = vmatprep.subr.bf16.mxu0 0
      %1225 = vmatpush1.bf16.xpose.msra.mxu0 0
      %1226 = vmatprep.subr.bf16.mxu0 0
      %1227 = vmatpush1.bf16.xpose.msra.mxu0 0
      %1228 = vmatprep.subr.bf16.mxu0 0
      %1229 = vmatpush1.bf16.xpose.msra.mxu0 0
      %1230 = vmatprep.subr.bf16.mxu0 0
      %1231 = vmatpush1.bf16.xpose.msra.mxu0 0
      %1232 = vmatprep.subr.bf16.mxu0 0
      %1233 = vmatpush1.bf16.xpose.msra.mxu0 0
      %1234 = vmatprep.subr.bf16.mxu0 0
      %1235 = vmatpush1.bf16.xpose.msra.mxu0 0
      %1236 = vmatprep.subr.bf16.mxu0 0
      %1237 = vmatpush1.bf16.xpose.msra.mxu0 0
      %1238 = vmatprep.mubr.bf16.mxu0 0
      %1239 = vmatmul.mubr.bf16.gmra.mrb[0].mxu0 %v1201
      %v1240 = vpop.f32.mrb[0].mxu0
      %v1241 = vadd.f32 0.0, %v1240
      %v1242 = vpop.f32.mrb[0].mxu0
      %v1243 = vpop.f32.mrb[0].mxu0
      %v1244 = vpop.f32.mrb[0].mxu0
      %1245 = vdwg.mxu0
      %v1247 = vsel %vm1199, %v1192, 0
      %v1250 = vsel %vm1199, %v1196, 0
      %1252 = vmatprep.subr.bf16.mxu0 0
      %1253 = vmatpush1.bf16.xpose.msra.mxu0 %v1250
      %1254 = vmatprep.subr.bf16.mxu0 0
      %1255 = vmatpush1.bf16.xpose.msra.mxu0 0
      %1256 = vmatprep.subr.bf16.mxu0 0
      %1257 = vmatpush1.bf16.xpose.msra.mxu0 0
      %1258 = vmatprep.subr.bf16.mxu0 0
      %1259 = vmatpush1.bf16.xpose.msra.mxu0 0
      %1260 = vmatprep.subr.bf16.mxu0 0
      %1261 = vmatpush1.bf16.xpose.msra.mxu0 0
      %1262 = vmatprep.subr.bf16.mxu0 0
      %1263 = vmatpush1.bf16.xpose.msra.mxu0 0
      %1264 = vmatprep.subr.bf16.mxu0 0
      %1265 = vmatpush1.bf16.xpose.msra.mxu0 0
      %1266 = vmatprep.subr.bf16.mxu0 0
      %1267 = vmatpush1.bf16.xpose.msra.mxu0 0
      %1268 = vmatprep.subr.bf16.mxu0 0
      %1269 = vmatpush1.bf16.xpose.msra.mxu0 0
      %1270 = vmatprep.subr.bf16.mxu0 0
      %1271 = vmatpush1.bf16.xpose.msra.mxu0 0
      %1272 = vmatprep.subr.bf16.mxu0 0
      %1273 = vmatpush1.bf16.xpose.msra.mxu0 0
      %1274 = vmatprep.subr.bf16.mxu0 0
      %1275 = vmatpush1.bf16.xpose.msra.mxu0 0
      %1276 = vmatprep.subr.bf16.mxu0 0
      %1277 = vmatpush1.bf16.xpose.msra.mxu0 0
      %1278 = vmatprep.subr.bf16.mxu0 0
      %1279 = vmatpush1.bf16.xpose.msra.mxu0 0
      %1280 = vmatprep.subr.bf16.mxu0 0
      %1281 = vmatpush1.bf16.xpose.msra.mxu0 0
      %1282 = vmatprep.subr.bf16.mxu0 0
      %1283 = vmatpush1.bf16.xpose.msra.mxu0 0
      %1284 = vmatprep.mubr.bf16.mxu0 0
      %1285 = vmatmul.mubr.bf16.gmra.mrb[0].mxu0 %v1247
      %v1286 = vpop.f32.mrb[0].mxu0
      %v1287 = vadd.f32 0.0, %v1286
      %v1288 = vpop.f32.mrb[0].mxu0
      %v1289 = vpop.f32.mrb[0].mxu0
      %v1290 = vpop.f32.mrb[0].mxu0
      %1291 = vdwg.mxu0
      %v1293 = vsel %vm1199, %v1193, 0
      %v1296 = vsel %vm1199, %v1197, 0
      %1298 = vmatprep.subr.bf16.mxu0 0
      %1299 = vmatpush1.bf16.xpose.msra.mxu0 %v1296
      %1300 = vmatprep.subr.bf16.mxu0 0
      %1301 = vmatpush1.bf16.xpose.msra.mxu0 0
      %1302 = vmatprep.subr.bf16.mxu0 0
      %1303 = vmatpush1.bf16.xpose.msra.mxu0 0
      %1304 = vmatprep.subr.bf16.mxu0 0
      %1305 = vmatpush1.bf16.xpose.msra.mxu0 0
      %1306 = vmatprep.subr.bf16.mxu0 0
      %1307 = vmatpush1.bf16.xpose.msra.mxu0 0
      %1308 = vmatprep.subr.bf16.mxu0 0
      %1309 = vmatpush1.bf16.xpose.msra.mxu0 0
      %1310 = vmatprep.subr.bf16.mxu0 0
      %1311 = vmatpush1.bf16.xpose.msra.mxu0 0
      %1312 = vmatprep.subr.bf16.mxu0 0
      %1313 = vmatpush1.bf16.xpose.msra.mxu0 0
      %1314 = vmatprep.subr.bf16.mxu0 0
      %1315 = vmatpush1.bf16.xpose.msra.mxu0 0
      %1316 = vmatprep.subr.bf16.mxu0 0
      %1317 = vmatpush1.bf16.xpose.msra.mxu0 0
      %1318 = vmatprep.subr.bf16.mxu0 0
      %1319 = vmatpush1.bf16.xpose.msra.mxu0 0
      %1320 = vmatprep.subr.bf16.mxu0 0
      %1321 = vmatpush1.bf16.xpose.msra.mxu0 0
      %1322 = vmatprep.subr.bf16.mxu0 0
      %1323 = vmatpush1.bf16.xpose.msra.mxu0 0
      %1324 = vmatprep.subr.bf16.mxu0 0
      %1325 = vmatpush1.bf16.xpose.msra.mxu0 0
      %1326 = vmatprep.subr.bf16.mxu0 0
      %1327 = vmatpush1.bf16.xpose.msra.mxu0 0
      %1328 = vmatprep.subr.bf16.mxu0 0
      %1329 = vmatpush1.bf16.xpose.msra.mxu0 0
      %1330 = vmatprep.mubr.bf16.mxu0 0
      %1331 = vmatmul.mubr.bf16.gmra.mrb[0].mxu0 %v1293
      %v1332 = vpop.f32.mrb[0].mxu0
      %v1333 = vadd.f32 0.0, %v1332
      %v1334 = vpop.f32.mrb[0].mxu0
      %v1335 = vpop.f32.mrb[0].mxu0
      %v1336 = vpop.f32.mrb[0].mxu0
      %1337 = vdwg.mxu0
      %v1339 = vsel %vm1199, %v1194, 0
      %v1342 = vsel %vm1199, %v1198, 0
      %1344 = vmatprep.subr.bf16.mxu0 0
      %1345 = vmatpush1.bf16.xpose.msra.mxu0 %v1342
      %1346 = vmatprep.subr.bf16.mxu0 0
      %1347 = vmatpush1.bf16.xpose.msra.mxu0 0
      %1348 = vmatprep.subr.bf16.mxu0 0
      %1349 = vmatpush1.bf16.xpose.msra.mxu0 0
      %1350 = vmatprep.subr.bf16.mxu0 0
      %1351 = vmatpush1.bf16.xpose.msra.mxu0 0
      %1352 = vmatprep.subr.bf16.mxu0 0
      %1353 = vmatpush1.bf16.xpose.msra.mxu0 0
      %1354 = vmatprep.subr.bf16.mxu0 0
      %1355 = vmatpush1.bf16.xpose.msra.mxu0 0
      %1356 = vmatprep.subr.bf16.mxu0 0
      %1357 = vmatpush1.bf16.xpose.msra.mxu0 0
      %1358 = vmatprep.subr.bf16.mxu0 0
      %1359 = vmatpush1.bf16.xpose.msra.mxu0 0
      %1360 = vmatprep.subr.bf16.mxu0 0
      %1361 = vmatpush1.bf16.xpose.msra.mxu0 0
      %1362 = vmatprep.subr.bf16.mxu0 0
      %1363 = vmatpush1.bf16.xpose.msra.mxu0 0
      %1364 = vmatprep.subr.bf16.mxu0 0
      %1365 = vmatpush1.bf16.xpose.msra.mxu0 0
      %1366 = vmatprep.subr.bf16.mxu0 0
      %1367 = vmatpush1.bf16.xpose.msra.mxu0 0
      %1368 = vmatprep.subr.bf16.mxu0 0
      %1369 = vmatpush1.bf16.xpose.msra.mxu0 0
      %1370 = vmatprep.subr.bf16.mxu0 0
      %1371 = vmatpush1.bf16.xpose.msra.mxu0 0
      %1372 = vmatprep.subr.bf16.mxu0 0
      %1373 = vmatpush1.bf16.xpose.msra.mxu0 0
      %1374 = vmatprep.subr.bf16.mxu0 0
      %1375 = vmatpush1.bf16.xpose.msra.mxu0 0
      %1376 = vmatprep.mubr.bf16.mxu0 0
      %1377 = vmatmul.mubr.bf16.gmra.mrb[0].mxu0 %v1339
      %v1378 = vpop.f32.mrb[0].mxu0
      %v1379 = vadd.f32 0.0, %v1378
      %v1380 = vpop.f32.mrb[0].mxu0
      %v1381 = vpop.f32.mrb[0].mxu0
      %v1382 = vpop.f32.mrb[0].mxu0
      %1383 = vdwg.mxu0
      %v1384 = vmul.f32 %v1241, 0.35355338
      %v1385 = vmul.f32 %v1287, 0.35355338
      %v1386 = vmul.f32 %v1333, 0.35355338
      %v1387 = vmul.f32 %v1379, 0.35355338
      %v1388 = vsel %vm1199, %v1384, -inf
      %1389 = vmax.xlane.f32.xlu0 %v1388
      %v1390 = vpop.xlane.xlu0 %1389
      %v1391 = vsel %vm1199, %v1385, -inf
      %1392 = vmax.xlane.f32.xlu0 %v1391
      %v1393 = vpop.xlane.xlu0 %1392
      %v1394 = vsel %vm1199, %v1386, -inf
      %1395 = vmax.xlane.f32.xlu0 %v1394
      %v1396 = vpop.xlane.xlu0 %1395
      %v1397 = vsel %vm1199, %v1387, -inf
      %1398 = vmax.xlane.f32.xlu0 %v1397
      %v1399 = vpop.xlane.xlu0 %1398
      %v1400 = vsub.f32 %v1384, %v1390
      %v1401 = vsub.f32 %v1385, %v1393
      %v1402 = vsub.f32 %v1386, %v1396
      %v1403 = vsub.f32 %v1387, %v1399
      %v1404 = vmul.f32 %v1400, 1.442695
      %v1405 = vpow.pop %v1404
      %v1406 = vmul.f32 %v1401, 1.442695
      %v1407 = vpow.pop %v1406
      %v1408 = vmul.f32 %v1402, 1.442695
      %v1409 = vpow.pop %v1408
      %v1410 = vmul.f32 %v1403, 1.442695
      %v1411 = vpow.pop %v1410
      %v1412 = vsel %vm1199, %v1405, 0.0
      %1413 = vadd.xlane.f32.xlu0 %v1412
      %v1414 = vpop.xlane.xlu0 %1413
      %v1415 = vsel %vm1199, %v1407, 0.0
      %1416 = vadd.xlane.f32.xlu0 %v1415
      %v1417 = vpop.xlane.xlu0 %1416
      %v1418 = vsel %vm1199, %v1409, 0.0
      %1419 = vadd.xlane.f32.xlu0 %v1418
      %v1420 = vpop.xlane.xlu0 %1419
      %v1421 = vsel %vm1199, %v1411, 0.0
      %1422 = vadd.xlane.f32.xlu0 %v1421
      %v1423 = vpop.xlane.xlu0 %1422
      %v1424 = vrcp.pop %v1414
      %v1425 = vrcp.pop %v1417
      %v1426 = vrcp.pop %v1420
      %v1427 = vrcp.pop %v1423
      %v1428 = vmul.f32 %v1405, %v1424
      %v1429 = vmul.f32 %v1407, %v1425
      %v1430 = vmul.f32 %v1409, %v1426
      %v1431 = vmul.f32 %v1411, %v1427
      %v1432 = vpack.c.bf16 %v1428, %v1428
      %v1433 = vpack.c.bf16 %v1429, %v1429
      %v1434 = vpack.c.bf16 %v1430, %v1430
      %v1435 = vpack.c.bf16 %v1431, %v1431
      %v1436 = vpack.c.bf16 %v1187, %v1187
      %v1437 = vpack.c.bf16 %v1188, %v1188
      %v1438 = vpack.c.bf16 %v1189, %v1189
      %v1439 = vpack.c.bf16 %v1190, %v1190
      %v1441 = vsel %vm1199, %v1432, 0
      %vm1443 = vcmask 1043456
      %v1445 = vsel %vm1443, %v1436, 0
      %1447 = vmatprep.subr.bf16.mxu0 0
      %1448 = vmatpush1.bf16.msra.mxu0 %v1445
      %1449 = vmatprep.subr.bf16.mxu0 0
      %1450 = vmatpush1.bf16.msra.mxu0 0
      %1451 = vmatprep.subr.bf16.mxu0 0
      %1452 = vmatpush1.bf16.msra.mxu0 0
      %1453 = vmatprep.subr.bf16.mxu0 0
      %1454 = vmatpush1.bf16.msra.mxu0 0
      %1455 = vmatprep.subr.bf16.mxu0 0
      %1456 = vmatpush1.bf16.msra.mxu0 0
      %1457 = vmatprep.subr.bf16.mxu0 0
      %1458 = vmatpush1.bf16.msra.mxu0 0
      %1459 = vmatprep.subr.bf16.mxu0 0
      %1460 = vmatpush1.bf16.msra.mxu0 0
      %1461 = vmatprep.subr.bf16.mxu0 0
      %1462 = vmatpush1.bf16.msra.mxu0 0
      %1463 = vmatprep.subr.bf16.mxu0 0
      %1464 = vmatpush1.bf16.msra.mxu0 0
      %1465 = vmatprep.subr.bf16.mxu0 0
      %1466 = vmatpush1.bf16.msra.mxu0 0
      %1467 = vmatprep.subr.bf16.mxu0 0
      %1468 = vmatpush1.bf16.msra.mxu0 0
      %1469 = vmatprep.subr.bf16.mxu0 0
      %1470 = vmatpush1.bf16.msra.mxu0 0
      %1471 = vmatprep.subr.bf16.mxu0 0
      %1472 = vmatpush1.bf16.msra.mxu0 0
      %1473 = vmatprep.subr.bf16.mxu0 0
      %1474 = vmatpush1.bf16.msra.mxu0 0
      %1475 = vmatprep.subr.bf16.mxu0 0
      %1476 = vmatpush1.bf16.msra.mxu0 0
      %1477 = vmatprep.subr.bf16.mxu0 0
      %1478 = vmatpush1.bf16.msra.mxu0 0
      %1479 = vmatprep.mubr.bf16.mxu0 0
      %1480 = vmatmul.mubr.bf16.gmra.mrb[0].mxu0 %v1441
      %v1481 = vpop.f32.mrb[0].mxu0
      %v1482 = vadd.f32 0.0, %v1481
      %v1483 = vpop.f32.mrb[0].mxu0
      %v1484 = vpop.f32.mrb[0].mxu0
      %v1485 = vpop.f32.mrb[0].mxu0
      %1486 = vdwg.mxu0
      %v1488 = vsel %vm1199, %v1433, 0
      %v1491 = vsel %vm1443, %v1437, 0
      %1493 = vmatprep.subr.bf16.mxu0 0
      %1494 = vmatpush1.bf16.msra.mxu0 %v1491
      %1495 = vmatprep.subr.bf16.mxu0 0
      %1496 = vmatpush1.bf16.msra.mxu0 0
      %1497 = vmatprep.subr.bf16.mxu0 0
      %1498 = vmatpush1.bf16.msra.mxu0 0
      %1499 = vmatprep.subr.bf16.mxu0 0
      %1500 = vmatpush1.bf16.msra.mxu0 0
      %1501 = vmatprep.subr.bf16.mxu0 0
      %1502 = vmatpush1.bf16.msra.mxu0 0
      %1503 = vmatprep.subr.bf16.mxu0 0
      %1504 = vmatpush1.bf16.msra.mxu0 0
      %1505 = vmatprep.subr.bf16.mxu0 0
      %1506 = vmatpush1.bf16.msra.mxu0 0
      %1507 = vmatprep.subr.bf16.mxu0 0
      %1508 = vmatpush1.bf16.msra.mxu0 0
      %1509 = vmatprep.subr.bf16.mxu0 0
      %1510 = vmatpush1.bf16.msra.mxu0 0
      %1511 = vmatprep.subr.bf16.mxu0 0
      %1512 = vmatpush1.bf16.msra.mxu0 0
      %1513 = vmatprep.subr.bf16.mxu0 0
      %1514 = vmatpush1.bf16.msra.mxu0 0
      %1515 = vmatprep.subr.bf16.mxu0 0
      %1516 = vmatpush1.bf16.msra.mxu0 0
      %1517 = vmatprep.subr.bf16.mxu0 0
      %1518 = vmatpush1.bf16.msra.mxu0 0
      %1519 = vmatprep.subr.bf16.mxu0 0
      %1520 = vmatpush1.bf16.msra.mxu0 0
      %1521 = vmatprep.subr.bf16.mxu0 0
      %1522 = vmatpush1.bf16.msra.mxu0 0
      %1523 = vmatprep.subr.bf16.mxu0 0
      %1524 = vmatpush1.bf16.msra.mxu0 0
      %1525 = vmatprep.mubr.bf16.mxu0 0
      %1526 = vmatmul.mubr.bf16.gmra.mrb[0].mxu0 %v1488
      %v1527 = vpop.f32.mrb[0].mxu0
      %v1528 = vadd.f32 0.0, %v1527
      %v1529 = vpop.f32.mrb[0].mxu0
      %v1530 = vpop.f32.mrb[0].mxu0
      %v1531 = vpop.f32.mrb[0].mxu0
      %1532 = vdwg.mxu0
      %v1534 = vsel %vm1199, %v1434, 0
      %v1537 = vsel %vm1443, %v1438, 0
      %1539 = vmatprep.subr.bf16.mxu0 0
      %1540 = vmatpush1.bf16.msra.mxu0 %v1537
      %1541 = vmatprep.subr.bf16.mxu0 0
      %1542 = vmatpush1.bf16.msra.mxu0 0
      %1543 = vmatprep.subr.bf16.mxu0 0
      %1544 = vmatpush1.bf16.msra.mxu0 0
      %1545 = vmatprep.subr.bf16.mxu0 0
      %1546 = vmatpush1.bf16.msra.mxu0 0
      %1547 = vmatprep.subr.bf16.mxu0 0
      %1548 = vmatpush1.bf16.msra.mxu0 0
      %1549 = vmatprep.subr.bf16.mxu0 0
      %1550 = vmatpush1.bf16.msra.mxu0 0
      %1551 = vmatprep.subr.bf16.mxu0 0
      %1552 = vmatpush1.bf16.msra.mxu0 0
      %1553 = vmatprep.subr.bf16.mxu0 0
      %1554 = vmatpush1.bf16.msra.mxu0 0
      %1555 = vmatprep.subr.bf16.mxu0 0
      %1556 = vmatpush1.bf16.msra.mxu0 0
      %1557 = vmatprep.subr.bf16.mxu0 0
      %1558 = vmatpush1.bf16.msra.mxu0 0
      %1559 = vmatprep.subr.bf16.mxu0 0
      %1560 = vmatpush1.bf16.msra.mxu0 0
      %1561 = vmatprep.subr.bf16.mxu0 0
      %1562 = vmatpush1.bf16.msra.mxu0 0
      %1563 = vmatprep.subr.bf16.mxu0 0
      %1564 = vmatpush1.bf16.msra.mxu0 0
      %1565 = vmatprep.subr.bf16.mxu0 0
      %1566 = vmatpush1.bf16.msra.mxu0 0
      %1567 = vmatprep.subr.bf16.mxu0 0
      %1568 = vmatpush1.bf16.msra.mxu0 0
      %1569 = vmatprep.subr.bf16.mxu0 0
      %1570 = vmatpush1.bf16.msra.mxu0 0
      %1571 = vmatprep.mubr.bf16.mxu0 0
      %1572 = vmatmul.mubr.bf16.gmra.mrb[0].mxu0 %v1534
      %v1573 = vpop.f32.mrb[0].mxu0
      %v1574 = vadd.f32 0.0, %v1573
      %v1575 = vpop.f32.mrb[0].mxu0
      %v1576 = vpop.f32.mrb[0].mxu0
      %v1577 = vpop.f32.mrb[0].mxu0
      %1578 = vdwg.mxu0
      %v1580 = vsel %vm1199, %v1435, 0
      %v1583 = vsel %vm1443, %v1439, 0
      %1585 = vmatprep.subr.bf16.mxu0 0
      %1586 = vmatpush1.bf16.msra.mxu0 %v1583
      %1587 = vmatprep.subr.bf16.mxu0 0
      %1588 = vmatpush1.bf16.msra.mxu0 0
      %1589 = vmatprep.subr.bf16.mxu0 0
      %1590 = vmatpush1.bf16.msra.mxu0 0
      %1591 = vmatprep.subr.bf16.mxu0 0
      %1592 = vmatpush1.bf16.msra.mxu0 0
      %1593 = vmatprep.subr.bf16.mxu0 0
      %1594 = vmatpush1.bf16.msra.mxu0 0
      %1595 = vmatprep.subr.bf16.mxu0 0
      %1596 = vmatpush1.bf16.msra.mxu0 0
      %1597 = vmatprep.subr.bf16.mxu0 0
      %1598 = vmatpush1.bf16.msra.mxu0 0
      %1599 = vmatprep.subr.bf16.mxu0 0
      %1600 = vmatpush1.bf16.msra.mxu0 0
      %1601 = vmatprep.subr.bf16.mxu0 0
      %1602 = vmatpush1.bf16.msra.mxu0 0
      %1603 = vmatprep.subr.bf16.mxu0 0
      %1604 = vmatpush1.bf16.msra.mxu0 0
      %1605 = vmatprep.subr.bf16.mxu0 0
      %1606 = vmatpush1.bf16.msra.mxu0 0
      %1607 = vmatprep.subr.bf16.mxu0 0
      %1608 = vmatpush1.bf16.msra.mxu0 0
      %1609 = vmatprep.subr.bf16.mxu0 0
      %1610 = vmatpush1.bf16.msra.mxu0 0
      %1611 = vmatprep.subr.bf16.mxu0 0
      %1612 = vmatpush1.bf16.msra.mxu0 0
      %1613 = vmatprep.subr.bf16.mxu0 0
      %1614 = vmatpush1.bf16.msra.mxu0 0
      %1615 = vmatprep.subr.bf16.mxu0 0
      %1616 = vmatpush1.bf16.msra.mxu0 0
      %1617 = vmatprep.mubr.bf16.mxu0 0
      %1618 = vmatmul.mubr.bf16.gmra.mrb[0].mxu0 %v1580
      %v1619 = vpop.f32.mrb[0].mxu0
      %v1620 = vadd.f32 0.0, %v1619
      %v1621 = vpop.f32.mrb[0].mxu0
      %v1622 = vpop.f32.mrb[0].mxu0
      %v1623 = vpop.f32.mrb[0].mxu0
      %1624 = vdwg.mxu0
      %v1625 = vcombine.low %v1482, %v1574
      %v1626 = vcombine.high %v1482, %v1574
      %v1628 = vunpack.c.l.s4 1983009808
      %v1629 = vunpack.c.0.s8 %v1628
      %v1630 = vlaneseq
      %v1631 = vshrl.u32 %v1630, 7
      %v1632 = vsub.s32 %v1629, %v1631
      %v1633 = vrot.slane %v1625, %v1632
      %v1635 = vunpack.c.l.s4 1983009808
      %v1636 = vunpack.c.0.s8 %v1635
      %v1637 = vlaneseq
      %v1638 = vshrl.u32 %v1637, 7
      %v1639 = vsub.s32 %v1636, %v1638
      %v1640 = vrot.slane %v1626, %v1639
      %v1641 = vcombine.low %v1528, %v1620
      %v1642 = vcombine.high %v1528, %v1620
      %v1644 = vunpack.c.l.s4 1983009808
      %v1645 = vunpack.c.0.s8 %v1644
      %v1646 = vlaneseq
      %v1647 = vshrl.u32 %v1646, 7
      %v1648 = vsub.s32 %v1645, %v1647
      %v1649 = vrot.slane %v1641, %v1648
      %v1651 = vunpack.c.l.s4 1983009808
      %v1652 = vunpack.c.0.s8 %v1651
      %v1653 = vlaneseq
      %v1654 = vshrl.u32 %v1653, 7
      %v1655 = vsub.s32 %v1652, %v1654
      %v1656 = vrot.slane %v1642, %v1655
      %v1657 = vcombine.low %v1633, %v1649
      %v1658 = vcombine.high %v1633, %v1649
      %v1660 = vunpack.c.l.s4 1934713408
      %v1661 = vunpack.c.0.s8 %v1660
      %v1662 = vlaneseq
      %v1663 = vshrl.u32 %v1662, 7
      %v1664 = vsub.s32 %v1661, %v1663
      %v1665 = vrot.slane %v1657, %v1664
      %v1667 = vunpack.c.l.s4 1934713408
      %v1668 = vunpack.c.0.s8 %v1667
      %v1669 = vlaneseq
      %v1670 = vshrl.u32 %v1669, 7
      %v1671 = vsub.s32 %v1668, %v1670
      %v1672 = vrot.slane %v1658, %v1671
      %v1673 = vcombine.low %v1640, %v1656
      %v1674 = vcombine.high %v1640, %v1656
      %v1676 = vunpack.c.l.s4 1934713408
      %v1677 = vunpack.c.0.s8 %v1676
      %v1678 = vlaneseq
      %v1679 = vshrl.u32 %v1678, 7
      %v1680 = vsub.s32 %v1677, %v1679
      %v1681 = vrot.slane %v1673, %v1680
      %v1683 = vunpack.c.l.s4 1934713408
      %v1684 = vunpack.c.0.s8 %v1683
      %v1685 = vlaneseq
      %v1686 = vshrl.u32 %v1685, 7
      %v1687 = vsub.s32 %v1684, %v1686
      %v1688 = vrot.slane %v1674, %v1687
      %v1689 = vcombine.high %v1665, 0.0
      %v1690 = vcombine.high %v1672, 0.0
      %v1691 = vcombine.high %v1681, 0.0
      %v1692 = vcombine.high %v1688, 0.0
      %v1693 = vcombine.low %v1665, %v1672
      %v1695 = vunpack.c.l.s4 1983009808
      %v1696 = vunpack.c.0.s8 %v1695
      %v1697 = vlaneseq
      %v1698 = vshrl.u32 %v1697, 7
      %v1699 = vsub.s32 %v1696, %v1698
      %v1700 = vrot.slane %v1693, %v1699
      %v1701 = vcombine.low %v1689, %v1690
      %v1703 = vunpack.c.l.s4 1983009808
      %v1704 = vunpack.c.0.s8 %v1703
      %v1705 = vlaneseq
      %v1706 = vshrl.u32 %v1705, 7
      %v1707 = vsub.s32 %v1704, %v1706
      %v1708 = vrot.slane %v1701, %v1707
      %v1709 = vcombine.low %v1681, %v1688
      %v1711 = vunpack.c.l.s4 1983009808
      %v1712 = vunpack.c.0.s8 %v1711
      %v1713 = vlaneseq
      %v1714 = vshrl.u32 %v1713, 7
      %v1715 = vsub.s32 %v1712, %v1714
      %v1716 = vrot.slane %v1709, %v1715
      %v1717 = vcombine.low %v1691, %v1692
      %v1719 = vunpack.c.l.s4 1983009808
      %v1720 = vunpack.c.0.s8 %v1719
      %v1721 = vlaneseq
      %v1722 = vshrl.u32 %v1721, 7
      %v1723 = vsub.s32 %v1720, %v1722
      %v1724 = vrot.slane %v1717, %v1723
      %v1725 = vcombine.low %v1700, %v1708
      %v1726 = vcombine.high %v1700, %v1708
      %v1728 = vunpack.c.l.s4 1934713408
      %v1729 = vunpack.c.0.s8 %v1728
      %v1730 = vlaneseq
      %v1731 = vshrl.u32 %v1730, 7
      %v1732 = vsub.s32 %v1729, %v1731
      %v1733 = vrot.slane %v1725, %v1732
      %v1735 = vunpack.c.l.s4 1934713408
      %v1736 = vunpack.c.0.s8 %v1735
      %v1737 = vlaneseq
      %v1738 = vshrl.u32 %v1737, 7
      %v1739 = vsub.s32 %v1736, %v1738
      %v1740 = vrot.slane %v1726, %v1739
      %v1741 = vcombine.low %v1716, %v1724
      %v1742 = vcombine.high %v1716, %v1724
      %v1744 = vunpack.c.l.s4 1934713408
      %v1745 = vunpack.c.0.s8 %v1744
      %v1746 = vlaneseq
      %v1747 = vshrl.u32 %v1746, 7
      %v1748 = vsub.s32 %v1745, %v1747
      %v1749 = vrot.slane %v1741, %v1748
      %v1751 = vunpack.c.l.s4 1934713408
      %v1752 = vunpack.c.0.s8 %v1751
      %v1753 = vlaneseq
      %v1754 = vshrl.u32 %v1753, 7
      %v1755 = vsub.s32 %v1752, %v1754
      %v1756 = vrot.slane %v1742, %v1755
      %v1757 = vcombine.low %v1733, %v1749
      %v1758 = vcombine.high %v1733, %v1749
      %v1759 = vcombine.low %v1740, %v1756
      %v1760 = vcombine.high %v1740, %v1756
      %1762 = vrot.lane.b32.xlu0 %v1758, 8
      %v1763 = vpop.permute.xlu0 %1762
      %1766 = vrot.lane.b32.xlu0 %v1759, 16
      %v1767 = vpop.permute.xlu0 %1766
      %1770 = vrot.lane.b32.xlu0 %v1760, 24
      %v1771 = vpop.permute.xlu0 %1770
      %v1773 = vsel %vm1199, %v1757, %v1763
      %vm1774 = vcmask 130048
      %v1775 = vsel %vm1774, %v1773, %v1767
      %vm1776 = vcmask 195584
      %v1777 = vsel %vm1776, %v1775, %v1771
      %v1778 = vpack.c.bf16 %v1777, %v1777
      %v1779 = vld [vmem:[%s610] sm:$0xf]
      %v1780 = vld [vmem:[%s610 + $0x4] sm:$0xf]
      %v1781 = vld [vmem:[%s610 + $0x8] sm:$0xf]
      %v1782 = vld [vmem:[%s610 + $0xc] sm:$0xf]
      %v1783 = vld [vmem:[%s613] sm:$0x1]
      %v1785 = vlaneseq
      %v1786 = vshrl.u32 %v1785, 7
      %v1787 = vsub.s32 0, %v1786
      %v1788 = vrot.slane %v1783, %v1787
      %v1794 = vunpack.c.l.b16 %v1779
      %v1795 = vunpack.c.l.b16 %v1780
      %v1796 = vunpack.c.l.b16 %v1781
      %v1797 = vunpack.c.l.b16 %v1782
      %v1798 = vpack.c.b16 %v1795, %v1794
      %v1799 = vpack.c.b16 %v1797, %v1796
      %v1803 = vsel %vm651, %v1778, 0
      %1805 = vmatprep.subr.bf16.mxu0 0
      %1806 = vmatpush1.bf16.msra.mxu0 %v1798
      %1807 = vmatprep.subr.bf16.mxu0 0
      %1808 = vmatpush1.bf16.msra.mxu0 %v1799
      %1809 = vmatprep.subr.bf16.mxu0 0
      %1810 = vmatpush1.bf16.msra.mxu0 0
      %1811 = vmatprep.subr.bf16.mxu0 0
      %1812 = vmatpush1.bf16.msra.mxu0 0
      %1813 = vmatprep.subr.bf16.mxu0 0
      %1814 = vmatpush1.bf16.msra.mxu0 0
      %1815 = vmatprep.subr.bf16.mxu0 0
      %1816 = vmatpush1.bf16.msra.mxu0 0
      %1817 = vmatprep.subr.bf16.mxu0 0
      %1818 = vmatpush1.bf16.msra.mxu0 0
      %1819 = vmatprep.subr.bf16.mxu0 0
      %1820 = vmatpush1.bf16.msra.mxu0 0
      %1821 = vmatprep.subr.bf16.mxu0 0
      %1822 = vmatpush1.bf16.msra.mxu0 0
      %1823 = vmatprep.subr.bf16.mxu0 0
      %1824 = vmatpush1.bf16.msra.mxu0 0
      %1825 = vmatprep.subr.bf16.mxu0 0
      %1826 = vmatpush1.bf16.msra.mxu0 0
      %1827 = vmatprep.subr.bf16.mxu0 0
      %1828 = vmatpush1.bf16.msra.mxu0 0
      %1829 = vmatprep.subr.bf16.mxu0 0
      %1830 = vmatpush1.bf16.msra.mxu0 0
      %1831 = vmatprep.subr.bf16.mxu0 0
      %1832 = vmatpush1.bf16.msra.mxu0 0
      %1833 = vmatprep.subr.bf16.mxu0 0
      %1834 = vmatpush1.bf16.msra.mxu0 0
      %1835 = vmatprep.subr.bf16.mxu0 0
      %1836 = vmatpush1.bf16.msra.mxu0 0
      %1837 = vmatprep.mubr.bf16.mxu0 0
      %1838 = vmatmul.mubr.bf16.gmra.mrb[0].mxu0 %v1803
      %v1839 = vpop.f32.mrb[0].mxu0
      %v1840 = vadd.f32 %v1788, %v1839
      %v1841 = vpop.f32.mrb[0].mxu0
      %v1842 = vpop.f32.mrb[0].mxu0
      %v1843 = vpop.f32.mrb[0].mxu0
      %1844 = vdwg.mxu0
      %v1845 = vadd.f32 %v648, %v1840
      %v1846 = vld [vmem:[%s616] sm:$0x1]
      %v1847 = vld [vmem:[%s619] sm:$0x1]
      %v1848 = vsel %vm651, %v1845, 0.0
      %1849 = vadd.xlane.f32.xlu0 %v1848
      %v1850 = vpop.xlane.xlu0 %1849
      %v1851 = vmul.f32 %v1850, %v655
      %v1852 = vmul.f32 %v1845, %v1845
      %v1853 = vsel %vm651, %v1852, 0.0
      %1854 = vadd.xlane.f32.xlu0 %v1853
      %v1855 = vpop.xlane.xlu0 %1854
      %v1856 = vmul.f32 %v1855, %v655
      %v1857 = vmul.f32 %v1851, %v1851
      %v1858 = vsub.f32 %v1856, %v1857
      %v1859 = vsub.f32 %v1845, %v1851
      %v1860 = vadd.f32 %v1858, 1e-05
      %v1861 = vrsqrt.pop %v1860
      %v1862 = vmul.f32 %v1859, %v1861
      %v1864 = vlaneseq
      %v1865 = vshrl.u32 %v1864, 7
      %v1866 = vsub.s32 0, %v1865
      %v1867 = vrot.slane %v1846, %v1866
      %v1869 = vmul.f32 %v1862, %v1867
      %v1871 = vlaneseq
      %v1872 = vshrl.u32 %v1871, 7
      %v1873 = vsub.s32 0, %v1872
      %v1874 = vrot.slane %v1847, %v1873
      %v1876 = vadd.f32 %v1869, %v1874
      %v1877 = vpack.c.bf16 %v1876, %v1876
      %v1878 = vld [vmem:[%s624] sm:$0xf]
      %v1879 = vld [vmem:[%s624 + $0x4] sm:$0xf]
      %v1880 = vld [vmem:[%s624 + $0x8] sm:$0xf]
      %v1881 = vld [vmem:[%s624 + $0xc] sm:$0xf]
      %v1882 = vld [vmem:[%s627] sm:$0x1]
      %v1884 = vlaneseq
      %v1885 = vshrl.u32 %v1884, 7
      %v1886 = vsub.s32 0, %v1885
      %v1887 = vrot.slane %v1882, %v1886
      %v1893 = vunpack.c.l.b16 %v1878
      %v1894 = vunpack.c.l.b16 %v1879
      %v1895 = vunpack.c.l.b16 %v1880
      %v1896 = vunpack.c.l.b16 %v1881
      %v1897 = vpack.c.b16 %v1894, %v1893
      %v1898 = vpack.c.b16 %v1896, %v1895
      %v1902 = vsel %vm651, %v1877, 0
      %1904 = vmatprep.subr.bf16.mxu0 0
      %1905 = vmatpush1.bf16.msra.mxu0 %v1897
      %1906 = vmatprep.subr.bf16.mxu0 0
      %1907 = vmatpush1.bf16.msra.mxu0 %v1898
      %1908 = vmatprep.subr.bf16.mxu0 0
      %1909 = vmatpush1.bf16.msra.mxu0 0
      %1910 = vmatprep.subr.bf16.mxu0 0
      %1911 = vmatpush1.bf16.msra.mxu0 0
      %1912 = vmatprep.subr.bf16.mxu0 0
      %1913 = vmatpush1.bf16.msra.mxu0 0
      %1914 = vmatprep.subr.bf16.mxu0 0
      %1915 = vmatpush1.bf16.msra.mxu0 0
      %1916 = vmatprep.subr.bf16.mxu0 0
      %1917 = vmatpush1.bf16.msra.mxu0 0
      %1918 = vmatprep.subr.bf16.mxu0 0
      %1919 = vmatpush1.bf16.msra.mxu0 0
      %1920 = vmatprep.subr.bf16.mxu0 0
      %1921 = vmatpush1.bf16.msra.mxu0 0
      %1922 = vmatprep.subr.bf16.mxu0 0
      %1923 = vmatpush1.bf16.msra.mxu0 0
      %1924 = vmatprep.subr.bf16.mxu0 0
      %1925 = vmatpush1.bf16.msra.mxu0 0
      %1926 = vmatprep.subr.bf16.mxu0 0
      %1927 = vmatpush1.bf16.msra.mxu0 0
      %1928 = vmatprep.subr.bf16.mxu0 0
      %1929 = vmatpush1.bf16.msra.mxu0 0
      %1930 = vmatprep.subr.bf16.mxu0 0
      %1931 = vmatpush1.bf16.msra.mxu0 0
      %1932 = vmatprep.subr.bf16.mxu0 0
      %1933 = vmatpush1.bf16.msra.mxu0 0
      %1934 = vmatprep.subr.bf16.mxu0 0
      %1935 = vmatpush1.bf16.msra.mxu0 0
      %1936 = vmatprep.mubr.bf16.mxu0 0
      %1937 = vmatmul.mubr.bf16.gmra.mrb[0].mxu0 %v1902
      %v1938 = vpop.f32.mrb[0].mxu0
      %v1939 = vadd.f32 %v1887, %v1938
      %v1940 = vpop.f32.mrb[0].mxu0
      %v1941 = vpop.f32.mrb[0].mxu0
      %v1942 = vpop.f32.mrb[0].mxu0
      %1943 = vdwg.mxu0
      %v1944 = vmax.f32 %v1939, 0.0
      %v1945 = vpack.c.bf16 %v1944, %v1944
      %v1946 = vld [vmem:[%s632] sm:$0xf]
      %v1947 = vld [vmem:[%s632 + $0x4] sm:$0xf]
      %v1948 = vld [vmem:[%s632 + $0x8] sm:$0xf]
      %v1949 = vld [vmem:[%s632 + $0xc] sm:$0xf]
      %v1950 = vld [vmem:[%s632 + $0x10] sm:$0xf]
      %v1951 = vld [vmem:[%s632 + $0x14] sm:$0xf]
      %v1952 = vld [vmem:[%s632 + $0x18] sm:$0xf]
      %v1953 = vld [vmem:[%s632 + $0x1c] sm:$0xf]
      %v1954 = vld [vmem:[%s635] sm:$0x1]
      %v1956 = vlaneseq
      %v1957 = vshrl.u32 %v1956, 7
      %v1958 = vsub.s32 0, %v1957
      %v1959 = vrot.slane %v1954, %v1958
      %v1969 = vunpack.c.l.b16 %v1946
      %v1970 = vunpack.c.l.b16 %v1947
      %v1971 = vunpack.c.l.b16 %v1948
      %v1972 = vunpack.c.l.b16 %v1949
      %v1973 = vunpack.c.l.b16 %v1950
      %v1974 = vunpack.c.l.b16 %v1951
      %v1975 = vunpack.c.l.b16 %v1952
      %v1976 = vunpack.c.l.b16 %v1953
      %v1977 = vpack.c.b16 %v1970, %v1969
      %v1978 = vpack.c.b16 %v1972, %v1971
      %v1979 = vpack.c.b16 %v1974, %v1973
      %v1980 = vpack.c.b16 %v1976, %v1975
      %vm1985 = vcmask 523264
      %v1987 = vsel %vm1985, %v1945, 0
      %1989 = vmatprep.subr.bf16.mxu0 0
      %1990 = vmatpush1.bf16.msra.mxu0 %v1977
      %1991 = vmatprep.subr.bf16.mxu0 0
      %1992 = vmatpush1.bf16.msra.mxu0 %v1978
      %1993 = vmatprep.subr.bf16.mxu0 0
      %1994 = vmatpush1.bf16.msra.mxu0 %v1979
      %1995 = vmatprep.subr.bf16.mxu0 0
      %1996 = vmatpush1.bf16.msra.mxu0 %v1980
      %1997 = vmatprep.subr.bf16.mxu0 0
      %1998 = vmatpush1.bf16.msra.mxu0 0
      %1999 = vmatprep.subr.bf16.mxu0 0
      %2000 = vmatpush1.bf16.msra.mxu0 0
      %2001 = vmatprep.subr.bf16.mxu0 0
      %2002 = vmatpush1.bf16.msra.mxu0 0
      %2003 = vmatprep.subr.bf16.mxu0 0
      %2004 = vmatpush1.bf16.msra.mxu0 0
      %2005 = vmatprep.subr.bf16.mxu0 0
      %2006 = vmatpush1.bf16.msra.mxu0 0
      %2007 = vmatprep.subr.bf16.mxu0 0
      %2008 = vmatpush1.bf16.msra.mxu0 0
      %2009 = vmatprep.subr.bf16.mxu0 0
      %2010 = vmatpush1.bf16.msra.mxu0 0
      %2011 = vmatprep.subr.bf16.mxu0 0
      %2012 = vmatpush1.bf16.msra.mxu0 0
      %2013 = vmatprep.subr.bf16.mxu0 0
      %2014 = vmatpush1.bf16.msra.mxu0 0
      %2015 = vmatprep.subr.bf16.mxu0 0
      %2016 = vmatpush1.bf16.msra.mxu0 0
      %2017 = vmatprep.subr.bf16.mxu0 0
      %2018 = vmatpush1.bf16.msra.mxu0 0
      %2019 = vmatprep.subr.bf16.mxu0 0
      %2020 = vmatpush1.bf16.msra.mxu0 0
      %2021 = vmatprep.mubr.bf16.mxu0 0
      %2022 = vmatmul.mubr.bf16.gmra.mrb[0].mxu0 %v1987
      %v2023 = vpop.f32.mrb[0].mxu0
      %v2024 = vadd.f32 %v1959, %v2023
      %v2025 = vpop.f32.mrb[0].mxu0
      %v2026 = vpop.f32.mrb[0].mxu0
      %v2027 = vpop.f32.mrb[0].mxu0
      %2028 = vdwg.mxu0
      %v2029 = vadd.f32 %v1845, %v2024
      %2030 = vst.msk [vmem:[#allocation2] sm:$0xff] %vm651, %v2029
      %v2031 = vpack.c.bf16 %v2029, %v2029
      %vm2032 = vcmask 257024
      %2033 = vst.msk [vmem:[%s639] sm:$0xf] %vm2032, %v2031
      %p2034 = scmp.lt.s32.totalorder %s28, 1
      %s2035 = scalar_select %p2034, %s28, 1
      %s2036 = smul.addr %s2035, 4
      %s2037 = scalar_lea.vmem %s13, %s2036
      // Predicated region
      $region77: #{vision_transformer_forward.2} parent=71 // pred_check
        %p2038 = pneg %p392
      $region78: #{vision_transformer_forward.2} parent=71 // pred_check_branch
        %2040 = sbr.rel (%p2038) target = $region80
      $region79: #{vision_transformer_forward.2} parent=71 // pred_region
        _
      $region80: #{vision_transformer_forward.2} parent=71 // pred_fallthru
        _
    $region72: #{vision_transformer_forward.2} parent=5 // pred_fallthru
      _
    %p2041 = scmp.le.s32.totalorder 2, %s19
    // Predicated region
    $region81: #{vision_transformer_forward.2} parent=5 // pred_check
      %p2042 = pneg %p2041
    $region82: #{vision_transformer_forward.2} parent=5 // pred_check_branch
      %2044 = sbr.rel (%p2042) target = $region84
    $region83: #{vision_transformer_forward.2} parent=5 // pred_region
      %s2045 = ssub.s32 %s19, 2
      // Predicated region
      $region85: #{vision_transformer_forward.2} parent=83 // pred_check
        %p2046 = pneg %p398
      $region86: #{vision_transformer_forward.2} parent=83 // pred_check_branch
        %2048 = sbr.rel (%p2046) target = $region88
      $region87: #{vision_transformer_forward.2} parent=83 // pred_region
        %p2049 = scmp.lt.s32.totalorder %s30, 1
        %s2050 = scalar_select %p2049, %s30, 1
        %s2051 = smul.addr %s2050, 4
        %s2052 = scalar_lea.vmem %s13, %s2051
      $region88: #{vision_transformer_forward.2} parent=83 // pred_fallthru
        _
    $region84: #{vision_transformer_forward.2} parent=5 // pred_fallthru
      _
  $region6: #{vision_transformer_forward.2} parent=0 // loop_footer
    %s23 = sadd.s32 1, %s19
  $region7: #{vision_transformer_forward.2} parent=0 // loop_footer_branch
    %18 = sbr.rel target = $region3
  $region8: #{vision_transformer_forward.2} parent=0 // loop_exit
    _

</llo_original>
